<compile_context>
chip_gen: v5e
topology: v5e:2x2
jax: 0.10.0
libtpu: 0.0.40
codegen_flags: <defaults>
</compile_context>

<pallas_src>
import functools

import jax
import jax.numpy as jnp
from jax import lax
from jax.experimental import pallas as pl
from jax.experimental.pallas import tpu as pltpu

# ----- constants from the PyTorch module -----
NUM_ATOM_TYPE = 120
NUM_CHIRALITY_TAG = 3
NUM_BOND_TYPE = 6
NUM_BOND_DIRECTION = 3

LANE = 128


def _round_up(x, m):
    return (x + m - 1) // m * m


def _pad2(a, rows, cols):
    """Zero-pad a 2-D array to (rows, cols)."""
    return jnp.zeros((rows, cols), a.dtype).at[: a.shape[0], : a.shape[1]].set(a)


# ----------------------------------------------------------------------------
# Fused kernel: all GIN layers in one invocation (no grid).
#   aggr  = A @ h + edge_sum                      (GINConv message + aggr='add')
#   out   = W2 @ relu(W1 @ aggr + b1) + b2        (GINConv.update / mlp)
#   out   = BatchNorm1d(out)  (training-mode batch stats, eps=1e-5)
#   out   = relu(out)         (all but the last layer; dropout p=0 -> identity)
# ----------------------------------------------------------------------------
def gin_stack_kernel(h0_ref, adj_ref, esum_ref, w1_ref, w2_ref, vecs_ref, out_ref,
                     *, num_layer: int, n_real: int, d_pad: int, eps: float = 1e-5):
    n_pad = h0_ref.shape[0]

    h = h0_ref[...]          # [Np, Dp] f32 initial node embeddings
    adj = adj_ref[...]       # [Np, Np] bf16 adjacency counts (loaded once)

    # BatchNorm row mask over the valid node rows — hoisted out of the loop.
    row = lax.broadcasted_iota(jnp.int32, (n_pad, d_pad), 0)
    mask = (row < n_real).astype(jnp.float32)
    inv_n = 1.0 / float(n_real)

    # num_layer is small and static -> unrolled Python loop: static per-layer
    # ref indices, static last-layer ReLU skip, no carried scratch needed.
    for l in range(num_layer):
        vecs = vecs_ref[l]                    # [4, 2*Dp] f32: b1 | b2 | gamma | beta
        b1 = vecs[0:1, :]
        b2 = vecs[1:2, :d_pad]
        gamma = vecs[2:3, :d_pad]
        beta = vecs[3:4, :d_pad]

        # --- GIN aggregation on the MXU: (A @ h) + per-node edge-embedding sum ---
        aggr = jnp.dot(adj, h.astype(jnp.bfloat16),
                       preferred_element_type=jnp.float32) + esum_ref[l]     # [Np, Dp]

        # --- MLP: Linear(D, 2D) -> ReLU -> Linear(2D, D)  (bf16 ops, f32 acc) ---
        hid = jnp.dot(aggr.astype(jnp.bfloat16), w1_ref[l],
                      preferred_element_type=jnp.float32) + b1               # [Np, 2Dp]
        hid = jnp.maximum(hid, 0.0)
        out = jnp.dot(hid.astype(jnp.bfloat16), w2_ref[l],
                      preferred_element_type=jnp.float32) + b2               # [Np, Dp]

        # --- BatchNorm1d over the valid node rows (single-pass sum / sumsq) ---
        om = out * mask
        mean = jnp.sum(om, axis=0, keepdims=True) * inv_n
        var = jnp.maximum(jnp.sum(om * om, axis=0, keepdims=True) * inv_n
                          - mean * mean, 0.0)
        out = (out - mean) * lax.rsqrt(var + eps) * gamma + beta

        if l < num_layer - 1:                 # ReLU on all but the last layer
            out = jnp.maximum(out, 0.0)
        h = out                               # dropout p=0 -> identity

    out_ref[...] = h


def gin_gnn_pallas(h0, adj, esum, w1, w2, vecs, n_real):
    num_layer, n_pad, d_pad = esum.shape
    d2 = w1.shape[-1]

    # Advisory cost estimate for XLA scheduling around the custom call.
    flops = num_layer * (2 * n_pad * n_pad * d_pad          # A @ h
                         + 2 * n_pad * d_pad * d2           # aggr @ W1
                         + 2 * n_pad * d2 * d_pad)          # hid @ W2
    in_bytes = sum(int(a.size) * a.dtype.itemsize
                   for a in (h0, adj, esum, w1, w2, vecs))
    out_bytes = n_pad * d_pad * 4

    # VMEM budget: all buffers are small and fully resident; leave headroom and
    # stay well under v7x's 64 MiB physical VMEM.
    vmem_limit = int(min(max(4 * (in_bytes + out_bytes), 8 << 20), 48 << 20))

    kernel = functools.partial(gin_stack_kernel, num_layer=int(num_layer),
                               n_real=int(n_real), d_pad=int(d_pad))
    vspec = pl.BlockSpec(memory_space=pltpu.MemorySpace.VMEM)
    return pl.pallas_call(
        kernel,
        out_shape=jax.ShapeDtypeStruct((n_pad, d_pad), jnp.float32),
        in_specs=[vspec] * 6,
        out_specs=vspec,
        compiler_params=pltpu.CompilerParams(vmem_limit_bytes=vmem_limit),
        cost_estimate=pl.CostEstimate(
            flops=int(flops),
            transcendentals=int(num_layer * d_pad),
            bytes_accessed=int(in_bytes + out_bytes)),
    )(h0, adj, esum, w1, w2, vecs)


# ----------------------------------------------------------------------------
# Parameter construction (deterministic, synthetic; shapes follow __init__).
# ----------------------------------------------------------------------------
def init_params(key, num_layer, emb_dim):
    keys = jax.random.split(key, 2 + 4 * num_layer)
    params = {
        "x_emb1": jax.random.normal(keys[0], (NUM_ATOM_TYPE, emb_dim), jnp.float32) * 0.1,
        "x_emb2": jax.random.normal(keys[1], (NUM_CHIRALITY_TAG, emb_dim), jnp.float32) * 0.1,
        "layers": [],
    }
    for l in range(num_layer):
        k = keys[2 + 4 * l: 2 + 4 * (l + 1)]
        layer = {
            "edge_emb1": jax.random.normal(k[0], (NUM_BOND_TYPE, emb_dim), jnp.float32) * 0.1,
            "edge_emb2": jax.random.normal(k[1], (NUM_BOND_DIRECTION, emb_dim), jnp.float32) * 0.1,
            # mlp: Linear(D, 2D) -> ReLU -> Linear(2D, D)
            "w1": jax.random.normal(k[2], (emb_dim, 2 * emb_dim), jnp.float32) * (1.0 / emb_dim ** 0.5),
            "b1": jnp.zeros((1, 2 * emb_dim), jnp.float32),
            "w2": jax.random.normal(k[3], (2 * emb_dim, emb_dim), jnp.float32) * (1.0 / (2 * emb_dim) ** 0.5),
            "b2": jnp.zeros((1, emb_dim), jnp.float32),
            # BatchNorm1d affine params
            "gamma": jnp.ones((1, emb_dim), jnp.float32),
            "beta": jnp.zeros((1, emb_dim), jnp.float32),
        }
        params["layers"].append(layer)
    return params


# ----------------------------------------------------------------------------
# GNN forward (JK='last', drop_ratio=0, gnn_type='gin').
# Embedding-table gathers, self-loop concat (GINConv uses fill_value=0 for the
# self-loop edge_attr), dense adjacency build and the per-layer edge-embedding
# scatter-add are glue (plain JAX); all message passing / MLP / BatchNorm for
# every layer runs in a single fused Pallas kernel.
# ----------------------------------------------------------------------------
@functools.partial(jax.jit, static_argnames=("num_layer", "emb_dim"))
def gnn_forward(params, x, edge_index, edge_attr, *, num_layer, emb_dim):
    n = x.shape[0]
    d = emb_dim
    n_pad = _round_up(max(n, 8), LANE)
    d_pad = _round_up(d, LANE)
    d2 = 2 * d_pad

    # x = x_embedding1(x[:,0]) + x_embedding2(x[:,1])
    h = (params["x_emb1"][x[:, 0]] + params["x_emb2"][x[:, 1]]).astype(jnp.float32)
    h0 = _pad2(h, n_pad, d_pad)

    # GINConv.forward: add_self_loops(edge_index, edge_attr, fill_value=0)
    loop_index = jnp.arange(n, dtype=edge_index.dtype)
    ei = jnp.concatenate([edge_index, jnp.stack([loop_index, loop_index])], axis=1)
    ea = jnp.concatenate([edge_attr, jnp.zeros((n, 2), dtype=edge_attr.dtype)], axis=0)
    src, dst = ei[0], ei[1]

    # Dense adjacency counts A[dst, src] (exact small integers in bf16); shared
    # across all layers.
    adj = jnp.zeros((n_pad, n_pad), jnp.float32).at[dst, src].add(1.0)
    adj = adj.astype(jnp.bfloat16)

    # Per-layer inputs: edge-embedding sums, weights (bf16) and the packed
    # per-layer vector block [b1 | b2 | gamma | beta] (one DMA per layer stack).
    esum_l, w1_l, w2_l, vecs_l = [], [], [], []
    for lp in params["layers"]:
        e_emb = (lp["edge_emb1"][ea[:, 0]] + lp["edge_emb2"][ea[:, 1]]).astype(jnp.float32)
        es = jnp.zeros((n_pad, d), jnp.float32).at[dst].add(e_emb)
        esum_l.append(_pad2(es, n_pad, d_pad))
        w1_l.append(_pad2(lp["w1"], d_pad, d2).astype(jnp.bfloat16))
        w2_l.append(_pad2(lp["w2"], d2, d_pad).astype(jnp.bfloat16))
        v = jnp.zeros((4, d2), jnp.float32)
        v = v.at[0, : lp["b1"].shape[1]].set(lp["b1"][0])
        v = v.at[1, :d].set(lp["b2"][0])
        v = v.at[2, :d].set(lp["gamma"][0])
        v = v.at[3, :d].set(lp["beta"][0])
        vecs_l.append(v)

    esum = jnp.stack(esum_l)      # [L, Np, Dp]  f32
    w1 = jnp.stack(w1_l)          # [L, Dp, 2Dp] bf16
    w2 = jnp.stack(w2_l)          # [L, 2Dp, Dp] bf16
    vecs = jnp.stack(vecs_l)      # [L, 4, 2Dp]  f32

    out = gin_gnn_pallas(h0, adj, esum, w1, w2, vecs, n)
    return out[:n, :d]            # JK == 'last'


if __name__ == "__main__":
    num_layer = 3
    emb_dim = 32
    n_nodes = 24
    n_edges = 40

    key = jax.random.PRNGKey(0)
    k_param, k_x0, k_x1, k_ei, k_ea0, k_ea1 = jax.random.split(key, 6)

    params = init_params(k_param, num_layer, emb_dim)

    # node features: [N, 2] integer (atom type, chirality tag)
    x = jnp.stack([
        jax.random.randint(k_x0, (n_nodes,), 0, NUM_ATOM_TYPE),
        jax.random.randint(k_x1, (n_nodes,), 0, NUM_CHIRALITY_TAG),
    ], axis=1).astype(jnp.int32)

    # edge_index: [2, E] ; edge_attr: [E, 2] integer (bond type, bond direction)
    edge_index = jax.random.randint(k_ei, (2, n_edges), 0, n_nodes).astype(jnp.int32)
    edge_attr = jnp.stack([
        jax.random.randint(k_ea0, (n_edges,), 0, NUM_BOND_TYPE),
        jax.random.randint(k_ea1, (n_edges,), 0, NUM_BOND_DIRECTION),
    ], axis=1).astype(jnp.int32)

    out = gnn_forward(params, x, edge_index, edge_attr,
                      num_layer=num_layer, emb_dim=emb_dim)
    out = jax.block_until_ready(out)
    assert out.shape == (n_nodes, emb_dim)
    print("KERNEL_OK")
</pallas_src>

<mosaic_0001>
module attributes {stable_mosaic.version = 11 : i64} {
  func.func @gin_stack_kernel(%arg0: memref<128x128xf32, #tpu.memory_space<vmem>>, %arg1: memref<128x128xbf16, #tpu.memory_space<vmem>>, %arg2: memref<3x128x128xf32, #tpu.memory_space<vmem>>, %arg3: memref<3x128x256xbf16, #tpu.memory_space<vmem>>, %arg4: memref<3x256x128xbf16, #tpu.memory_space<vmem>>, %arg5: memref<3x4x256xf32, #tpu.memory_space<vmem>>, %arg6: memref<128x128xf32, #tpu.memory_space<vmem>>) attributes {dimension_semantics = [], scalar_prefetch = 0 : i64, scratch_operands = 0 : i64, tpu.core_type = #tpu.core_type<tc>} {
    %c0 = arith.constant 0 : index
    %c0_0 = arith.constant 0 : index
    %0 = vector.load %arg0[%c0, %c0_0] : memref<128x128xf32, #tpu.memory_space<vmem>>, vector<128x128xf32>
    %c0_1 = arith.constant 0 : index
    %c0_2 = arith.constant 0 : index
    %1 = vector.load %arg1[%c0_1, %c0_2] : memref<128x128xbf16, #tpu.memory_space<vmem>>, vector<128x128xbf16>
    %2 = tpu.iota {dimensions = array<i32: 0>} : vector<128x128xi32>
    %c24_i32 = arith.constant 24 : i32
    %3 = vector.broadcast %c24_i32 : i32 to vector<128x128xi32>
    %4 = arith.cmpi slt, %2, %3 : vector<128x128xi32>
    %5 = arith.extui %4 : vector<128x128xi1> to vector<128x128xi32>
    %6 = arith.sitofp %5 : vector<128x128xi32> to vector<128x128xf32>
    %c0_3 = arith.constant 0 : index
    %c0_4 = arith.constant 0 : index
    %c0_5 = arith.constant 0 : index
    %7 = vector.load %arg5[%c0_3, %c0_4, %c0_5] : memref<3x4x256xf32, #tpu.memory_space<vmem>>, vector<1x4x256xf32>
    %8 = vector.shape_cast %7 : vector<1x4x256xf32> to vector<4x256xf32>
    %9 = vector.extract_strided_slice %8 {offsets = [0, 0], sizes = [1, 256], strides = [1, 1]} : vector<4x256xf32> to vector<1x256xf32>
    %10 = vector.extract_strided_slice %8 {offsets = [1, 0], sizes = [1, 128], strides = [1, 1]} : vector<4x256xf32> to vector<1x128xf32>
    %11 = vector.extract_strided_slice %8 {offsets = [2, 0], sizes = [1, 128], strides = [1, 1]} : vector<4x256xf32> to vector<1x128xf32>
    %12 = vector.extract_strided_slice %8 {offsets = [3, 0], sizes = [1, 128], strides = [1, 1]} : vector<4x256xf32> to vector<1x128xf32>
    %13 = arith.truncf %0 : vector<128x128xf32> to vector<128x128xbf16>
    %cst = arith.constant dense<0.000000e+00> : vector<128x128xf32>
    %14 = tpu.matmul %1, %13, %cst {dimension_numbers = #tpu.dot_dimension_numbers<[1], [0], [0], [1], [0, 0, 1, 1], [], []>} : vector<128x128xbf16>, vector<128x128xbf16>, vector<128x128xf32> -> vector<128x128xf32>
    %c0_6 = arith.constant 0 : index
    %c0_7 = arith.constant 0 : index
    %c0_8 = arith.constant 0 : index
    %15 = vector.load %arg2[%c0_6, %c0_7, %c0_8] : memref<3x128x128xf32, #tpu.memory_space<vmem>>, vector<1x128x128xf32>
    %16 = vector.shape_cast %15 : vector<1x128x128xf32> to vector<128x128xf32>
    %17 = arith.addf %14, %16 : vector<128x128xf32>
    %18 = arith.truncf %17 : vector<128x128xf32> to vector<128x128xbf16>
    %c0_9 = arith.constant 0 : index
    %c0_10 = arith.constant 0 : index
    %c0_11 = arith.constant 0 : index
    %19 = vector.load %arg3[%c0_9, %c0_10, %c0_11] : memref<3x128x256xbf16, #tpu.memory_space<vmem>>, vector<1x128x256xbf16>
    %20 = vector.shape_cast %19 : vector<1x128x256xbf16> to vector<128x256xbf16>
    %cst_12 = arith.constant dense<0.000000e+00> : vector<128x256xf32>
    %21 = tpu.matmul %18, %20, %cst_12 {dimension_numbers = #tpu.dot_dimension_numbers<[1], [0], [0], [1], [0, 0, 1, 1], [], []>} : vector<128x128xbf16>, vector<128x256xbf16>, vector<128x256xf32> -> vector<128x256xf32>
    %22 = vector.broadcast %9 : vector<1x256xf32> to vector<128x256xf32>
    %23 = arith.addf %21, %22 : vector<128x256xf32>
    %cst_13 = arith.constant 0.000000e+00 : f32
    %24 = vector.broadcast %cst_13 : f32 to vector<128x256xf32>
    %25 = arith.maximumf %23, %24 : vector<128x256xf32>
    %26 = arith.truncf %25 : vector<128x256xf32> to vector<128x256xbf16>
    %c0_14 = arith.constant 0 : index
    %c0_15 = arith.constant 0 : index
    %c0_16 = arith.constant 0 : index
    %27 = vector.load %arg4[%c0_14, %c0_15, %c0_16] : memref<3x256x128xbf16, #tpu.memory_space<vmem>>, vector<1x256x128xbf16>
    %28 = vector.shape_cast %27 : vector<1x256x128xbf16> to vector<256x128xbf16>
    %cst_17 = arith.constant dense<0.000000e+00> : vector<128x128xf32>
    %29 = tpu.matmul %26, %28, %cst_17 {dimension_numbers = #tpu.dot_dimension_numbers<[1], [0], [0], [1], [0, 0, 1, 1], [], []>} : vector<128x256xbf16>, vector<256x128xbf16>, vector<128x128xf32> -> vector<128x128xf32>
    %30 = vector.broadcast %10 : vector<1x128xf32> to vector<128x128xf32>
    %31 = arith.addf %29, %30 : vector<128x128xf32>
    %32 = arith.mulf %31, %6 : vector<128x128xf32>
    %cst_18 = arith.constant dense<0.000000e+00> : vector<128xf32>
    %33 = vector.multi_reduction <add>, %32, %cst_18 [0] : vector<128x128xf32> to vector<128xf32>
    %34 = vector.shape_cast %33 : vector<128xf32> to vector<1x128xf32>
    %cst_19 = arith.constant 0.0416666679 : f32
    %35 = vector.broadcast %cst_19 : f32 to vector<1x128xf32>
    %36 = arith.mulf %34, %35 : vector<1x128xf32>
    %37 = arith.mulf %32, %32 : vector<128x128xf32>
    %cst_20 = arith.constant dense<0.000000e+00> : vector<128xf32>
    %38 = vector.multi_reduction <add>, %37, %cst_20 [0] : vector<128x128xf32> to vector<128xf32>
    %39 = vector.shape_cast %38 : vector<128xf32> to vector<1x128xf32>
    %cst_21 = arith.constant 0.0416666679 : f32
    %40 = vector.broadcast %cst_21 : f32 to vector<1x128xf32>
    %41 = arith.mulf %39, %40 : vector<1x128xf32>
    %42 = arith.mulf %36, %36 : vector<1x128xf32>
    %43 = arith.subf %41, %42 : vector<1x128xf32>
    %cst_22 = arith.constant 0.000000e+00 : f32
    %44 = vector.broadcast %cst_22 : f32 to vector<1x128xf32>
    %45 = arith.maximumf %43, %44 : vector<1x128xf32>
    %46 = vector.broadcast %36 : vector<1x128xf32> to vector<128x128xf32>
    %47 = arith.subf %31, %46 : vector<128x128xf32>
    %cst_23 = arith.constant 9.99999974E-6 : f32
    %48 = vector.broadcast %cst_23 : f32 to vector<1x128xf32>
    %49 = arith.addf %45, %48 : vector<1x128xf32>
    %50 = math.rsqrt %49 : vector<1x128xf32>
    %51 = vector.broadcast %50 : vector<1x128xf32> to vector<128x128xf32>
    %52 = arith.mulf %47, %51 : vector<128x128xf32>
    %53 = vector.broadcast %11 : vector<1x128xf32> to vector<128x128xf32>
    %54 = arith.mulf %52, %53 : vector<128x128xf32>
    %55 = vector.broadcast %12 : vector<1x128xf32> to vector<128x128xf32>
    %56 = arith.addf %54, %55 : vector<128x128xf32>
    %cst_24 = arith.constant 0.000000e+00 : f32
    %57 = vector.broadcast %cst_24 : f32 to vector<128x128xf32>
    %58 = arith.maximumf %56, %57 : vector<128x128xf32>
    %c1 = arith.constant 1 : index
    %c0_25 = arith.constant 0 : index
    %c0_26 = arith.constant 0 : index
    %59 = vector.load %arg5[%c1, %c0_25, %c0_26] : memref<3x4x256xf32, #tpu.memory_space<vmem>>, vector<1x4x256xf32>
    %60 = vector.shape_cast %59 : vector<1x4x256xf32> to vector<4x256xf32>
    %61 = vector.extract_strided_slice %60 {offsets = [0, 0], sizes = [1, 256], strides = [1, 1]} : vector<4x256xf32> to vector<1x256xf32>
    %62 = vector.extract_strided_slice %60 {offsets = [1, 0], sizes = [1, 128], strides = [1, 1]} : vector<4x256xf32> to vector<1x128xf32>
    %63 = vector.extract_strided_slice %60 {offsets = [2, 0], sizes = [1, 128], strides = [1, 1]} : vector<4x256xf32> to vector<1x128xf32>
    %64 = vector.extract_strided_slice %60 {offsets = [3, 0], sizes = [1, 128], strides = [1, 1]} : vector<4x256xf32> to vector<1x128xf32>
    %65 = arith.truncf %58 : vector<128x128xf32> to vector<128x128xbf16>
    %cst_27 = arith.constant dense<0.000000e+00> : vector<128x128xf32>
    %66 = tpu.matmul %1, %65, %cst_27 {dimension_numbers = #tpu.dot_dimension_numbers<[1], [0], [0], [1], [0, 0, 1, 1], [], []>} : vector<128x128xbf16>, vector<128x128xbf16>, vector<128x128xf32> -> vector<128x128xf32>
    %c1_28 = arith.constant 1 : index
    %c0_29 = arith.constant 0 : index
    %c0_30 = arith.constant 0 : index
    %67 = vector.load %arg2[%c1_28, %c0_29, %c0_30] : memref<3x128x128xf32, #tpu.memory_space<vmem>>, vector<1x128x128xf32>
    %68 = vector.shape_cast %67 : vector<1x128x128xf32> to vector<128x128xf32>
    %69 = arith.addf %66, %68 : vector<128x128xf32>
    %70 = arith.truncf %69 : vector<128x128xf32> to vector<128x128xbf16>
    %c1_31 = arith.constant 1 : index
    %c0_32 = arith.constant 0 : index
    %c0_33 = arith.constant 0 : index
    %71 = vector.load %arg3[%c1_31, %c0_32, %c0_33] : memref<3x128x256xbf16, #tpu.memory_space<vmem>>, vector<1x128x256xbf16>
    %72 = vector.shape_cast %71 : vector<1x128x256xbf16> to vector<128x256xbf16>
    %cst_34 = arith.constant dense<0.000000e+00> : vector<128x256xf32>
    %73 = tpu.matmul %70, %72, %cst_34 {dimension_numbers = #tpu.dot_dimension_numbers<[1], [0], [0], [1], [0, 0, 1, 1], [], []>} : vector<128x128xbf16>, vector<128x256xbf16>, vector<128x256xf32> -> vector<128x256xf32>
    %74 = vector.broadcast %61 : vector<1x256xf32> to vector<128x256xf32>
    %75 = arith.addf %73, %74 : vector<128x256xf32>
    %cst_35 = arith.constant 0.000000e+00 : f32
    %76 = vector.broadcast %cst_35 : f32 to vector<128x256xf32>
    %77 = arith.maximumf %75, %76 : vector<128x256xf32>
    %78 = arith.truncf %77 : vector<128x256xf32> to vector<128x256xbf16>
    %c1_36 = arith.constant 1 : index
    %c0_37 = arith.constant 0 : index
    %c0_38 = arith.constant 0 : index
    %79 = vector.load %arg4[%c1_36, %c0_37, %c0_38] : memref<3x256x128xbf16, #tpu.memory_space<vmem>>, vector<1x256x128xbf16>
    %80 = vector.shape_cast %79 : vector<1x256x128xbf16> to vector<256x128xbf16>
    %cst_39 = arith.constant dense<0.000000e+00> : vector<128x128xf32>
    %81 = tpu.matmul %78, %80, %cst_39 {dimension_numbers = #tpu.dot_dimension_numbers<[1], [0], [0], [1], [0, 0, 1, 1], [], []>} : vector<128x256xbf16>, vector<256x128xbf16>, vector<128x128xf32> -> vector<128x128xf32>
    %82 = vector.broadcast %62 : vector<1x128xf32> to vector<128x128xf32>
    %83 = arith.addf %81, %82 : vector<128x128xf32>
    %84 = arith.mulf %83, %6 : vector<128x128xf32>
    %cst_40 = arith.constant dense<0.000000e+00> : vector<128xf32>
    %85 = vector.multi_reduction <add>, %84, %cst_40 [0] : vector<128x128xf32> to vector<128xf32>
    %86 = vector.shape_cast %85 : vector<128xf32> to vector<1x128xf32>
    %cst_41 = arith.constant 0.0416666679 : f32
    %87 = vector.broadcast %cst_41 : f32 to vector<1x128xf32>
    %88 = arith.mulf %86, %87 : vector<1x128xf32>
    %89 = arith.mulf %84, %84 : vector<128x128xf32>
    %cst_42 = arith.constant dense<0.000000e+00> : vector<128xf32>
    %90 = vector.multi_reduction <add>, %89, %cst_42 [0] : vector<128x128xf32> to vector<128xf32>
    %91 = vector.shape_cast %90 : vector<128xf32> to vector<1x128xf32>
    %cst_43 = arith.constant 0.0416666679 : f32
    %92 = vector.broadcast %cst_43 : f32 to vector<1x128xf32>
    %93 = arith.mulf %91, %92 : vector<1x128xf32>
    %94 = arith.mulf %88, %88 : vector<1x128xf32>
    %95 = arith.subf %93, %94 : vector<1x128xf32>
    %cst_44 = arith.constant 0.000000e+00 : f32
    %96 = vector.broadcast %cst_44 : f32 to vector<1x128xf32>
    %97 = arith.maximumf %95, %96 : vector<1x128xf32>
    %98 = vector.broadcast %88 : vector<1x128xf32> to vector<128x128xf32>
    %99 = arith.subf %83, %98 : vector<128x128xf32>
    %cst_45 = arith.constant 9.99999974E-6 : f32
    %100 = vector.broadcast %cst_45 : f32 to vector<1x128xf32>
    %101 = arith.addf %97, %100 : vector<1x128xf32>
    %102 = math.rsqrt %101 : vector<1x128xf32>
    %103 = vector.broadcast %102 : vector<1x128xf32> to vector<128x128xf32>
    %104 = arith.mulf %99, %103 : vector<128x128xf32>
    %105 = vector.broadcast %63 : vector<1x128xf32> to vector<128x128xf32>
    %106 = arith.mulf %104, %105 : vector<128x128xf32>
    %107 = vector.broadcast %64 : vector<1x128xf32> to vector<128x128xf32>
    %108 = arith.addf %106, %107 : vector<128x128xf32>
    %cst_46 = arith.constant 0.000000e+00 : f32
    %109 = vector.broadcast %cst_46 : f32 to vector<128x128xf32>
    %110 = arith.maximumf %108, %109 : vector<128x128xf32>
    %c2 = arith.constant 2 : index
    %c0_47 = arith.constant 0 : index
    %c0_48 = arith.constant 0 : index
    %111 = vector.load %arg5[%c2, %c0_47, %c0_48] : memref<3x4x256xf32, #tpu.memory_space<vmem>>, vector<1x4x256xf32>
    %112 = vector.shape_cast %111 : vector<1x4x256xf32> to vector<4x256xf32>
    %113 = vector.extract_strided_slice %112 {offsets = [0, 0], sizes = [1, 256], strides = [1, 1]} : vector<4x256xf32> to vector<1x256xf32>
    %114 = vector.extract_strided_slice %112 {offsets = [1, 0], sizes = [1, 128], strides = [1, 1]} : vector<4x256xf32> to vector<1x128xf32>
    %115 = vector.extract_strided_slice %112 {offsets = [2, 0], sizes = [1, 128], strides = [1, 1]} : vector<4x256xf32> to vector<1x128xf32>
    %116 = vector.extract_strided_slice %112 {offsets = [3, 0], sizes = [1, 128], strides = [1, 1]} : vector<4x256xf32> to vector<1x128xf32>
    %117 = arith.truncf %110 : vector<128x128xf32> to vector<128x128xbf16>
    %cst_49 = arith.constant dense<0.000000e+00> : vector<128x128xf32>
    %118 = tpu.matmul %1, %117, %cst_49 {dimension_numbers = #tpu.dot_dimension_numbers<[1], [0], [0], [1], [0, 0, 1, 1], [], []>} : vector<128x128xbf16>, vector<128x128xbf16>, vector<128x128xf32> -> vector<128x128xf32>
    %c2_50 = arith.constant 2 : index
    %c0_51 = arith.constant 0 : index
    %c0_52 = arith.constant 0 : index
    %119 = vector.load %arg2[%c2_50, %c0_51, %c0_52] : memref<3x128x128xf32, #tpu.memory_space<vmem>>, vector<1x128x128xf32>
    %120 = vector.shape_cast %119 : vector<1x128x128xf32> to vector<128x128xf32>
    %121 = arith.addf %118, %120 : vector<128x128xf32>
    %122 = arith.truncf %121 : vector<128x128xf32> to vector<128x128xbf16>
    %c2_53 = arith.constant 2 : index
    %c0_54 = arith.constant 0 : index
    %c0_55 = arith.constant 0 : index
    %123 = vector.load %arg3[%c2_53, %c0_54, %c0_55] : memref<3x128x256xbf16, #tpu.memory_space<vmem>>, vector<1x128x256xbf16>
    %124 = vector.shape_cast %123 : vector<1x128x256xbf16> to vector<128x256xbf16>
    %cst_56 = arith.constant dense<0.000000e+00> : vector<128x256xf32>
    %125 = tpu.matmul %122, %124, %cst_56 {dimension_numbers = #tpu.dot_dimension_numbers<[1], [0], [0], [1], [0, 0, 1, 1], [], []>} : vector<128x128xbf16>, vector<128x256xbf16>, vector<128x256xf32> -> vector<128x256xf32>
    %126 = vector.broadcast %113 : vector<1x256xf32> to vector<128x256xf32>
    %127 = arith.addf %125, %126 : vector<128x256xf32>
    %cst_57 = arith.constant 0.000000e+00 : f32
    %128 = vector.broadcast %cst_57 : f32 to vector<128x256xf32>
    %129 = arith.maximumf %127, %128 : vector<128x256xf32>
    %130 = arith.truncf %129 : vector<128x256xf32> to vector<128x256xbf16>
    %c2_58 = arith.constant 2 : index
    %c0_59 = arith.constant 0 : index
    %c0_60 = arith.constant 0 : index
    %131 = vector.load %arg4[%c2_58, %c0_59, %c0_60] : memref<3x256x128xbf16, #tpu.memory_space<vmem>>, vector<1x256x128xbf16>
    %132 = vector.shape_cast %131 : vector<1x256x128xbf16> to vector<256x128xbf16>
    %cst_61 = arith.constant dense<0.000000e+00> : vector<128x128xf32>
    %133 = tpu.matmul %130, %132, %cst_61 {dimension_numbers = #tpu.dot_dimension_numbers<[1], [0], [0], [1], [0, 0, 1, 1], [], []>} : vector<128x256xbf16>, vector<256x128xbf16>, vector<128x128xf32> -> vector<128x128xf32>
    %134 = vector.broadcast %114 : vector<1x128xf32> to vector<128x128xf32>
    %135 = arith.addf %133, %134 : vector<128x128xf32>
    %136 = arith.mulf %135, %6 : vector<128x128xf32>
    %cst_62 = arith.constant dense<0.000000e+00> : vector<128xf32>
    %137 = vector.multi_reduction <add>, %136, %cst_62 [0] : vector<128x128xf32> to vector<128xf32>
    %138 = vector.shape_cast %137 : vector<128xf32> to vector<1x128xf32>
    %cst_63 = arith.constant 0.0416666679 : f32
    %139 = vector.broadcast %cst_63 : f32 to vector<1x128xf32>
    %140 = arith.mulf %138, %139 : vector<1x128xf32>
    %141 = arith.mulf %136, %136 : vector<128x128xf32>
    %cst_64 = arith.constant dense<0.000000e+00> : vector<128xf32>
    %142 = vector.multi_reduction <add>, %141, %cst_64 [0] : vector<128x128xf32> to vector<128xf32>
    %143 = vector.shape_cast %142 : vector<128xf32> to vector<1x128xf32>
    %cst_65 = arith.constant 0.0416666679 : f32
    %144 = vector.broadcast %cst_65 : f32 to vector<1x128xf32>
    %145 = arith.mulf %143, %144 : vector<1x128xf32>
    %146 = arith.mulf %140, %140 : vector<1x128xf32>
    %147 = arith.subf %145, %146 : vector<1x128xf32>
    %cst_66 = arith.constant 0.000000e+00 : f32
    %148 = vector.broadcast %cst_66 : f32 to vector<1x128xf32>
    %149 = arith.maximumf %147, %148 : vector<1x128xf32>
    %150 = vector.broadcast %140 : vector<1x128xf32> to vector<128x128xf32>
    %151 = arith.subf %135, %150 : vector<128x128xf32>
    %cst_67 = arith.constant 9.99999974E-6 : f32
    %152 = vector.broadcast %cst_67 : f32 to vector<1x128xf32>
    %153 = arith.addf %149, %152 : vector<1x128xf32>
    %154 = math.rsqrt %153 : vector<1x128xf32>
    %155 = vector.broadcast %154 : vector<1x128xf32> to vector<128x128xf32>
    %156 = arith.mulf %151, %155 : vector<128x128xf32>
    %157 = vector.broadcast %115 : vector<1x128xf32> to vector<128x128xf32>
    %158 = arith.mulf %156, %157 : vector<128x128xf32>
    %159 = vector.broadcast %116 : vector<1x128xf32> to vector<128x128xf32>
    %160 = arith.addf %158, %159 : vector<128x128xf32>
    %c0_68 = arith.constant 0 : index
    %c0_69 = arith.constant 0 : index
    %161 = vector.load %arg6[%c0_68, %c0_69] : memref<128x128xf32, #tpu.memory_space<vmem>>, vector<128x128xf32>
    tpu.vector_store %arg6[%c0_68, %c0_69], %160 {strides = array<i32>} : memref<128x128xf32, #tpu.memory_space<vmem>>, vector<128x128xf32>,
    return
  }
}

</mosaic_0001>

<llo_original>
// kernel: gnn_forward.1
$region0: #{gnn_forward.1}
  #allocation0 [shape = 'u32[]', space=smem, size = 0x4, offset = 0x4, fixed_abs, tag = 'smem constant byte address 0x4 - core index']
  #allocation1 [shape = 'u32[72,128]{1,0:T(1,128)}', space=vmem, size = 0x9000, scoped, tag = 'internal scratch']
  %s0 = inlined_call_operand.vmem [shape: f32[128,128], index: 0, kind: input, shape index: {}]
  %s1 = inlined_call_operand.vmem [shape: bf16[128,128], index: 1, kind: input, shape index: {}]
  %s2 = inlined_call_operand.vmem [shape: f32[3,128,128], index: 2, kind: input, shape index: {}]
  %s3 = inlined_call_operand.vmem [shape: bf16[3,128,256], index: 3, kind: input, shape index: {}]
  %s4 = inlined_call_operand.vmem [shape: bf16[3,256,128], index: 4, kind: input, shape index: {}]
  %s5 = inlined_call_operand.vmem [shape: f32[3,4,256], index: 5, kind: input, shape index: {}]
  %s6 = inlined_call_operand.vmem [shape: f32[128,128], index: 6, kind: output, shape index: {}]
  %s7 = sld [smem:[#allocation0]]
  $region34: #{gnn_forward.1} parent=0
    _
  %s9 = ssub.s32 1, %s7
  %s10 = scalar_select 0, %s9, %s7
  // Predicated region
  $region2: #{gnn_forward.1} parent=0 // pred_check
    _
  $region3: #{gnn_forward.1} parent=0 // pred_check_branch
    %12 = sbr.rel (0) target = $region5
  $region4: #{gnn_forward.1} parent=0 // pred_region
    _
  $region5: #{gnn_forward.1} parent=0 // pred_fallthru
    _
  // Predicated region
  $region6: #{gnn_forward.1} parent=0 // pred_check
    _
  $region7: #{gnn_forward.1} parent=0 // pred_check_branch
    %14 = sbr.rel (0) target = $region9
  $region8: #{gnn_forward.1} parent=0 // pred_region
    _
  $region9: #{gnn_forward.1} parent=0 // pred_fallthru
    _
  // Predicated region
  $region10: #{gnn_forward.1} parent=0 // pred_check
    _
  $region11: #{gnn_forward.1} parent=0 // pred_check_branch
    %16 = sbr.rel (0) target = $region13
  $region12: #{gnn_forward.1} parent=0 // pred_region
    _
  $region13: #{gnn_forward.1} parent=0 // pred_fallthru
    _
  // Predicated region
  $region14: #{gnn_forward.1} parent=0 // pred_check
    _
  $region15: #{gnn_forward.1} parent=0 // pred_check_branch
    %18 = sbr.rel (0) target = $region17
  $region16: #{gnn_forward.1} parent=0 // pred_region
    _
  $region17: #{gnn_forward.1} parent=0 // pred_fallthru
    _
  // Predicated region
  $region18: #{gnn_forward.1} parent=0 // pred_check
    _
  $region19: #{gnn_forward.1} parent=0 // pred_check_branch
    %20 = sbr.rel (0) target = $region21
  $region20: #{gnn_forward.1} parent=0 // pred_region
    _
  $region21: #{gnn_forward.1} parent=0 // pred_fallthru
    _
  // Predicated region
  $region22: #{gnn_forward.1} parent=0 // pred_check
    _
  $region23: #{gnn_forward.1} parent=0 // pred_check_branch
    %22 = sbr.rel (0) target = $region25
  $region24: #{gnn_forward.1} parent=0 // pred_region
    _
  $region25: #{gnn_forward.1} parent=0 // pred_fallthru
    _
  %v23 = vld [vmem:[%s0] sm:$0xff]
  %v24 = vld [vmem:[%s0 + $0x8] sm:$0xff]
  %v25 = vld [vmem:[%s0 + $0x10] sm:$0xff]
  %v26 = vld [vmem:[%s0 + $0x18] sm:$0xff]
  %v27 = vld [vmem:[%s0 + $0x20] sm:$0xff]
  %v28 = vld [vmem:[%s0 + $0x28] sm:$0xff]
  %v29 = vld [vmem:[%s0 + $0x30] sm:$0xff]
  %v30 = vld [vmem:[%s0 + $0x38] sm:$0xff]
  %v31 = vld [vmem:[%s0 + $0x40] sm:$0xff]
  %v32 = vld [vmem:[%s0 + $0x48] sm:$0xff]
  %v33 = vld [vmem:[%s0 + $0x50] sm:$0xff]
  %v34 = vld [vmem:[%s0 + $0x58] sm:$0xff]
  %v35 = vld [vmem:[%s0 + $0x60] sm:$0xff]
  %v36 = vld [vmem:[%s0 + $0x68] sm:$0xff]
  %v37 = vld [vmem:[%s0 + $0x70] sm:$0xff]
  %v38 = vld [vmem:[%s0 + $0x78] sm:$0xff]
  %v39 = vld [vmem:[%s1] sm:$0xf]
  %v40 = vld [vmem:[%s1 + $0x4] sm:$0xf]
  %v41 = vld [vmem:[%s1 + $0x8] sm:$0xf]
  %v42 = vld [vmem:[%s1 + $0xc] sm:$0xf]
  %v43 = vld [vmem:[%s1 + $0x10] sm:$0xf]
  %v44 = vld [vmem:[%s1 + $0x14] sm:$0xf]
  %v45 = vld [vmem:[%s1 + $0x18] sm:$0xf]
  %v46 = vld [vmem:[%s1 + $0x1c] sm:$0xf]
  %v47 = vld [vmem:[%s1 + $0x20] sm:$0xf]
  %v48 = vld [vmem:[%s1 + $0x24] sm:$0xf]
  %v49 = vld [vmem:[%s1 + $0x28] sm:$0xf]
  %v50 = vld [vmem:[%s1 + $0x2c] sm:$0xf]
  %v51 = vld [vmem:[%s1 + $0x30] sm:$0xf]
  %v52 = vld [vmem:[%s1 + $0x34] sm:$0xf]
  %v53 = vld [vmem:[%s1 + $0x38] sm:$0xf]
  %v54 = vld [vmem:[%s1 + $0x3c] sm:$0xf]
  %v55 = vlaneseq
  %v56 = vshrl.u32 %v55, 7
  %v57 = vadd.s32 %v56, 8
  %v58 = vadd.s32 %v56, 16
  %v59 = vadd.s32 %v56, 24
  %v60 = vadd.s32 %v56, 32
  %v61 = vadd.s32 %v56, 40
  %v62 = vadd.s32 %v56, 48
  %v63 = vadd.s32 %v56, 56
  %v64 = vadd.s32 %v56, 64
  %v65 = vadd.s32 %v56, 72
  %v66 = vadd.s32 %v56, 80
  %v67 = vadd.s32 %v56, 88
  %v68 = vadd.s32 %v56, 96
  %v69 = vadd.s32 %v56, 104
  %v70 = vadd.s32 %v56, 112
  %v71 = vadd.s32 %v56, 120
  %vm72 = vcmp.lt.s32.totalorder %v56, 24
  %vm73 = vcmp.lt.s32.totalorder %v57, 24
  %vm74 = vcmp.lt.s32.totalorder %v58, 24
  %vm75 = vcmp.lt.s32.totalorder %v59, 24
  %vm76 = vcmp.lt.s32.totalorder %v60, 24
  %vm77 = vcmp.lt.s32.totalorder %v61, 24
  %vm78 = vcmp.lt.s32.totalorder %v62, 24
  %vm79 = vcmp.lt.s32.totalorder %v63, 24
  %vm80 = vcmp.lt.s32.totalorder %v64, 24
  %vm81 = vcmp.lt.s32.totalorder %v65, 24
  %vm82 = vcmp.lt.s32.totalorder %v66, 24
  %vm83 = vcmp.lt.s32.totalorder %v67, 24
  %vm84 = vcmp.lt.s32.totalorder %v68, 24
  %vm85 = vcmp.lt.s32.totalorder %v69, 24
  %vm86 = vcmp.lt.s32.totalorder %v70, 24
  %vm87 = vcmp.lt.s32.totalorder %v71, 24
  %v88 = vsel %vm72, 1, 0
  %v89 = vsel %vm73, 1, 0
  %v90 = vsel %vm74, 1, 0
  %v91 = vsel %vm75, 1, 0
  %v92 = vsel %vm76, 1, 0
  %v93 = vsel %vm77, 1, 0
  %v94 = vsel %vm78, 1, 0
  %v95 = vsel %vm79, 1, 0
  %v96 = vsel %vm80, 1, 0
  %v97 = vsel %vm81, 1, 0
  %v98 = vsel %vm82, 1, 0
  %v99 = vsel %vm83, 1, 0
  %v100 = vsel %vm84, 1, 0
  %v101 = vsel %vm85, 1, 0
  %v102 = vsel %vm86, 1, 0
  %v103 = vsel %vm87, 1, 0
  %v104 = vcvt.s32.f32 %v88
  %v105 = vcvt.s32.f32 %v89
  %v106 = vcvt.s32.f32 %v90
  %v107 = vcvt.s32.f32 %v91
  %v108 = vcvt.s32.f32 %v92
  %v109 = vcvt.s32.f32 %v93
  %v110 = vcvt.s32.f32 %v94
  %v111 = vcvt.s32.f32 %v95
  %v112 = vcvt.s32.f32 %v96
  %v113 = vcvt.s32.f32 %v97
  %v114 = vcvt.s32.f32 %v98
  %v115 = vcvt.s32.f32 %v99
  %v116 = vcvt.s32.f32 %v100
  %v117 = vcvt.s32.f32 %v101
  %v118 = vcvt.s32.f32 %v102
  %v119 = vcvt.s32.f32 %v103
  %v120 = vld [vmem:[%s5] sm:$0xff]
  %v121 = vpack.c.bf16 %v24, %v23
  %v122 = vpack.c.bf16 %v26, %v25
  %v123 = vpack.c.bf16 %v28, %v27
  %v124 = vpack.c.bf16 %v30, %v29
  %v125 = vpack.c.bf16 %v32, %v31
  %v126 = vpack.c.bf16 %v34, %v33
  %v127 = vpack.c.bf16 %v36, %v35
  %v128 = vpack.c.bf16 %v38, %v37
  %v129 = vld [vmem:[%s2] sm:$0xff]
  %v130 = vld [vmem:[%s2 + $0x8] sm:$0xff]
  %v131 = vld [vmem:[%s2 + $0x10] sm:$0xff]
  %v132 = vld [vmem:[%s2 + $0x18] sm:$0xff]
  %v133 = vld [vmem:[%s2 + $0x20] sm:$0xff]
  %v134 = vld [vmem:[%s2 + $0x28] sm:$0xff]
  %v135 = vld [vmem:[%s2 + $0x30] sm:$0xff]
  %v136 = vld [vmem:[%s2 + $0x38] sm:$0xff]
  %v137 = vld [vmem:[%s2 + $0x40] sm:$0xff]
  %v138 = vld [vmem:[%s2 + $0x48] sm:$0xff]
  %v139 = vld [vmem:[%s2 + $0x50] sm:$0xff]
  %v140 = vld [vmem:[%s2 + $0x58] sm:$0xff]
  %v141 = vld [vmem:[%s2 + $0x60] sm:$0xff]
  %v142 = vld [vmem:[%s2 + $0x68] sm:$0xff]
  %v143 = vld [vmem:[%s2 + $0x70] sm:$0xff]
  %v144 = vld [vmem:[%s2 + $0x78] sm:$0xff]
  %v161 = vunpack.c.l.b16 %v39
  %v162 = vunpack.c.l.b16 %v40
  %v163 = vunpack.c.l.b16 %v41
  %v164 = vunpack.c.l.b16 %v42
  %v165 = vunpack.c.l.b16 %v43
  %v166 = vunpack.c.l.b16 %v44
  %v167 = vunpack.c.l.b16 %v45
  %v168 = vunpack.c.l.b16 %v46
  %v169 = vunpack.c.l.b16 %v47
  %v170 = vunpack.c.l.b16 %v48
  %v171 = vunpack.c.l.b16 %v49
  %v172 = vunpack.c.l.b16 %v50
  %v173 = vunpack.c.l.b16 %v51
  %v174 = vunpack.c.l.b16 %v52
  %v175 = vunpack.c.l.b16 %v53
  %v176 = vunpack.c.l.b16 %v54
  %v177 = vpack.c.b16 %v162, %v161
  %v178 = vpack.c.b16 %v164, %v163
  %v179 = vpack.c.b16 %v166, %v165
  %v180 = vpack.c.b16 %v168, %v167
  %v181 = vpack.c.b16 %v170, %v169
  %v182 = vpack.c.b16 %v172, %v171
  %v183 = vpack.c.b16 %v174, %v173
  %v184 = vpack.c.b16 %v176, %v175
  %193 = vmatpush.bf16.msra.mxu0 %v128
  %194 = vmatpush.bf16.msra.mxu0 %v127
  %195 = vmatpush.bf16.msra.mxu0 %v126
  %196 = vmatpush.bf16.msra.mxu0 %v125
  %197 = vmatpush.bf16.msra.mxu0 %v124
  %198 = vmatpush.bf16.msra.mxu0 %v123
  %199 = vmatpush.bf16.msra.mxu0 %v122
  %200 = vmatpush.bf16.msra.mxu0 %v121
  %201 = vmatmul.bf16.gmra.mxu0 %v177
  %v202 = vpop.f32.mrf.mxu0
  %v203 = vadd.f32 %v129, %v202
  %v204 = vpop.f32.mrf.mxu0
  %v205 = vadd.f32 %v130, %v204
  %206 = vmatmul.bf16.gmra.mxu0 %v178
  %v207 = vpop.f32.mrf.mxu0
  %v208 = vadd.f32 %v131, %v207
  %v209 = vpop.f32.mrf.mxu0
  %v210 = vadd.f32 %v132, %v209
  %211 = vmatmul.bf16.gmra.mxu0 %v179
  %v212 = vpop.f32.mrf.mxu0
  %v213 = vadd.f32 %v133, %v212
  %v214 = vpop.f32.mrf.mxu0
  %v215 = vadd.f32 %v134, %v214
  %216 = vmatmul.bf16.gmra.mxu0 %v180
  %v217 = vpop.f32.mrf.mxu0
  %v218 = vadd.f32 %v135, %v217
  %v219 = vpop.f32.mrf.mxu0
  %v220 = vadd.f32 %v136, %v219
  %221 = vmatmul.bf16.gmra.mxu0 %v181
  %v222 = vpop.f32.mrf.mxu0
  %v223 = vadd.f32 %v137, %v222
  %v224 = vpop.f32.mrf.mxu0
  %v225 = vadd.f32 %v138, %v224
  %226 = vmatmul.bf16.gmra.mxu0 %v182
  %v227 = vpop.f32.mrf.mxu0
  %v228 = vadd.f32 %v139, %v227
  %v229 = vpop.f32.mrf.mxu0
  %v230 = vadd.f32 %v140, %v229
  %231 = vmatmul.bf16.gmra.mxu0 %v183
  %v232 = vpop.f32.mrf.mxu0
  %v233 = vadd.f32 %v141, %v232
  %v234 = vpop.f32.mrf.mxu0
  %v235 = vadd.f32 %v142, %v234
  %236 = vmatmul.bf16.gmra.mxu0 %v184
  %v237 = vpop.f32.mrf.mxu0
  %v238 = vadd.f32 %v143, %v237
  %v239 = vpop.f32.mrf.mxu0
  %v240 = vadd.f32 %v144, %v239
  %241 = vdwg.mxu0
  %v242 = vpack.c.bf16 %v205, %v203
  %v243 = vpack.c.bf16 %v210, %v208
  %v244 = vpack.c.bf16 %v215, %v213
  %v245 = vpack.c.bf16 %v220, %v218
  %v246 = vpack.c.bf16 %v225, %v223
  %v247 = vpack.c.bf16 %v230, %v228
  %v248 = vpack.c.bf16 %v235, %v233
  %v249 = vpack.c.bf16 %v240, %v238
  %v250 = vld [vmem:[%s3] sm:$0xff]
  %v251 = vld [vmem:[%s3 + $0x8] sm:$0xff]
  %v252 = vld [vmem:[%s3 + $0x10] sm:$0xff]
  %v253 = vld [vmem:[%s3 + $0x18] sm:$0xff]
  %v254 = vld [vmem:[%s3 + $0x20] sm:$0xff]
  %v255 = vld [vmem:[%s3 + $0x28] sm:$0xff]
  %v256 = vld [vmem:[%s3 + $0x30] sm:$0xff]
  %v257 = vld [vmem:[%s3 + $0x38] sm:$0xff]
  %v258 = vld [vmem:[%s3 + $0x40] sm:$0xff]
  %v259 = vld [vmem:[%s3 + $0x48] sm:$0xff]
  %v260 = vld [vmem:[%s3 + $0x50] sm:$0xff]
  %v261 = vld [vmem:[%s3 + $0x58] sm:$0xff]
  %v262 = vld [vmem:[%s3 + $0x60] sm:$0xff]
  %v263 = vld [vmem:[%s3 + $0x68] sm:$0xff]
  %v264 = vld [vmem:[%s3 + $0x70] sm:$0xff]
  %v265 = vld [vmem:[%s3 + $0x78] sm:$0xff]
  %v267 = vperm.slane %v120, 0
  %v268 = vperm.slane %v120, 4
  %v271 = vperm.slane %v267, 0
  %v272 = vperm.slane %v268, 0
  %v289 = vunpack.c.l.b16 %v250
  %v290 = vunpack.c.h.b16 %v250
  %v291 = vunpack.c.l.b16 %v251
  %v292 = vunpack.c.h.b16 %v251
  %v293 = vunpack.c.l.b16 %v252
  %v294 = vunpack.c.h.b16 %v252
  %v295 = vunpack.c.l.b16 %v253
  %v296 = vunpack.c.h.b16 %v253
  %v297 = vunpack.c.l.b16 %v254
  %v298 = vunpack.c.h.b16 %v254
  %v299 = vunpack.c.l.b16 %v255
  %v300 = vunpack.c.h.b16 %v255
  %v301 = vunpack.c.l.b16 %v256
  %v302 = vunpack.c.h.b16 %v256
  %v303 = vunpack.c.l.b16 %v257
  %v304 = vunpack.c.h.b16 %v257
  %v305 = vunpack.c.l.b16 %v258
  %v306 = vunpack.c.h.b16 %v258
  %v307 = vunpack.c.l.b16 %v259
  %v308 = vunpack.c.h.b16 %v259
  %v309 = vunpack.c.l.b16 %v260
  %v310 = vunpack.c.h.b16 %v260
  %v311 = vunpack.c.l.b16 %v261
  %v312 = vunpack.c.h.b16 %v261
  %v313 = vunpack.c.l.b16 %v262
  %v314 = vunpack.c.h.b16 %v262
  %v315 = vunpack.c.l.b16 %v263
  %v316 = vunpack.c.h.b16 %v263
  %v317 = vunpack.c.l.b16 %v264
  %v318 = vunpack.c.h.b16 %v264
  %v319 = vunpack.c.l.b16 %v265
  %v320 = vunpack.c.h.b16 %v265
  %v321 = vpack.c.b16 %v291, %v289
  %v322 = vpack.c.b16 %v292, %v290
  %v323 = vpack.c.b16 %v295, %v293
  %v324 = vpack.c.b16 %v296, %v294
  %v325 = vpack.c.b16 %v299, %v297
  %v326 = vpack.c.b16 %v300, %v298
  %v327 = vpack.c.b16 %v303, %v301
  %v328 = vpack.c.b16 %v304, %v302
  %v329 = vpack.c.b16 %v307, %v305
  %v330 = vpack.c.b16 %v308, %v306
  %v331 = vpack.c.b16 %v311, %v309
  %v332 = vpack.c.b16 %v312, %v310
  %v333 = vpack.c.b16 %v315, %v313
  %v334 = vpack.c.b16 %v316, %v314
  %v335 = vpack.c.b16 %v319, %v317
  %v336 = vpack.c.b16 %v320, %v318
  %353 = vmatpush.bf16.msra.mxu0 %v335
  %354 = vmatpush.bf16.msra.mxu0 %v333
  %355 = vmatpush.bf16.msra.mxu0 %v331
  %356 = vmatpush.bf16.msra.mxu0 %v329
  %357 = vmatpush.bf16.msra.mxu0 %v327
  %358 = vmatpush.bf16.msra.mxu0 %v325
  %359 = vmatpush.bf16.msra.mxu0 %v323
  %360 = vmatpush.bf16.msra.mxu0 %v321
  %361 = vmatmul.bf16.gmra.mxu0 %v242
  %v362 = vpop.f32.mrf.mxu0
  %v363 = vadd.f32 %v271, %v362
  %v364 = vpop.f32.mrf.mxu0
  %v365 = vadd.f32 %v271, %v364
  %366 = vmatmul.bf16.gmra.mxu0 %v243
  %v367 = vpop.f32.mrf.mxu0
  %v368 = vadd.f32 %v271, %v367
  %v369 = vpop.f32.mrf.mxu0
  %v370 = vadd.f32 %v271, %v369
  %371 = vmatmul.bf16.gmra.mxu0 %v244
  %v372 = vpop.f32.mrf.mxu0
  %v373 = vadd.f32 %v271, %v372
  %v374 = vpop.f32.mrf.mxu0
  %v375 = vadd.f32 %v271, %v374
  %376 = vmatmul.bf16.gmra.mxu0 %v245
  %v377 = vpop.f32.mrf.mxu0
  %v378 = vadd.f32 %v271, %v377
  %v379 = vpop.f32.mrf.mxu0
  %v380 = vadd.f32 %v271, %v379
  %381 = vmatmul.bf16.gmra.mxu0 %v246
  %v382 = vpop.f32.mrf.mxu0
  %v383 = vadd.f32 %v271, %v382
  %v384 = vpop.f32.mrf.mxu0
  %v385 = vadd.f32 %v271, %v384
  %386 = vmatmul.bf16.gmra.mxu0 %v247
  %v387 = vpop.f32.mrf.mxu0
  %v388 = vadd.f32 %v271, %v387
  %v389 = vpop.f32.mrf.mxu0
  %v390 = vadd.f32 %v271, %v389
  %391 = vmatmul.bf16.gmra.mxu0 %v248
  %v392 = vpop.f32.mrf.mxu0
  %v393 = vadd.f32 %v271, %v392
  %v394 = vpop.f32.mrf.mxu0
  %v395 = vadd.f32 %v271, %v394
  %396 = vmatmul.bf16.gmra.mxu0 %v249
  %v397 = vpop.f32.mrf.mxu0
  %v398 = vadd.f32 %v271, %v397
  %v399 = vpop.f32.mrf.mxu0
  %v400 = vadd.f32 %v271, %v399
  %401 = vdwg.mxu0
  %402 = vmatpush.bf16.msra.mxu0 %v336
  %403 = vmatpush.bf16.msra.mxu0 %v334
  %404 = vmatpush.bf16.msra.mxu0 %v332
  %405 = vmatpush.bf16.msra.mxu0 %v330
  %406 = vmatpush.bf16.msra.mxu0 %v328
  %407 = vmatpush.bf16.msra.mxu0 %v326
  %408 = vmatpush.bf16.msra.mxu0 %v324
  %409 = vmatpush.bf16.msra.mxu0 %v322
  %410 = vmatmul.bf16.gmra.mxu0 %v242
  %v411 = vpop.f32.mrf.mxu0
  %v412 = vadd.f32 %v272, %v411
  %v413 = vpop.f32.mrf.mxu0
  %v414 = vadd.f32 %v272, %v413
  %415 = vmatmul.bf16.gmra.mxu0 %v243
  %v416 = vpop.f32.mrf.mxu0
  %v417 = vadd.f32 %v272, %v416
  %v418 = vpop.f32.mrf.mxu0
  %v419 = vadd.f32 %v272, %v418
  %420 = vmatmul.bf16.gmra.mxu0 %v244
  %v421 = vpop.f32.mrf.mxu0
  %v422 = vadd.f32 %v272, %v421
  %v423 = vpop.f32.mrf.mxu0
  %v424 = vadd.f32 %v272, %v423
  %425 = vmatmul.bf16.gmra.mxu0 %v245
  %v426 = vpop.f32.mrf.mxu0
  %v427 = vadd.f32 %v272, %v426
  %v428 = vpop.f32.mrf.mxu0
  %v429 = vadd.f32 %v272, %v428
  %430 = vmatmul.bf16.gmra.mxu0 %v246
  %v431 = vpop.f32.mrf.mxu0
  %v432 = vadd.f32 %v272, %v431
  %v433 = vpop.f32.mrf.mxu0
  %v434 = vadd.f32 %v272, %v433
  %435 = vmatmul.bf16.gmra.mxu0 %v247
  %v436 = vpop.f32.mrf.mxu0
  %v437 = vadd.f32 %v272, %v436
  %v438 = vpop.f32.mrf.mxu0
  %v439 = vadd.f32 %v272, %v438
  %440 = vmatmul.bf16.gmra.mxu0 %v248
  %v441 = vpop.f32.mrf.mxu0
  %v442 = vadd.f32 %v272, %v441
  %v443 = vpop.f32.mrf.mxu0
  %v444 = vadd.f32 %v272, %v443
  %445 = vmatmul.bf16.gmra.mxu0 %v249
  %v446 = vpop.f32.mrf.mxu0
  %v447 = vadd.f32 %v272, %v446
  %v448 = vpop.f32.mrf.mxu0
  %v449 = vadd.f32 %v272, %v448
  %450 = vdwg.mxu0
  %v451 = vmax.f32 %v363, 0.0
  %v452 = vmax.f32 %v412, 0.0
  %v453 = vmax.f32 %v365, 0.0
  %v454 = vmax.f32 %v414, 0.0
  %v455 = vmax.f32 %v368, 0.0
  %v456 = vmax.f32 %v417, 0.0
  %v457 = vmax.f32 %v370, 0.0
  %v458 = vmax.f32 %v419, 0.0
  %v459 = vmax.f32 %v373, 0.0
  %v460 = vmax.f32 %v422, 0.0
  %v461 = vmax.f32 %v375, 0.0
  %v462 = vmax.f32 %v424, 0.0
  %v463 = vmax.f32 %v378, 0.0
  %v464 = vmax.f32 %v427, 0.0
  %v465 = vmax.f32 %v380, 0.0
  %v466 = vmax.f32 %v429, 0.0
  %v467 = vmax.f32 %v383, 0.0
  %v468 = vmax.f32 %v432, 0.0
  %v469 = vmax.f32 %v385, 0.0
  %v470 = vmax.f32 %v434, 0.0
  %v471 = vmax.f32 %v388, 0.0
  %v472 = vmax.f32 %v437, 0.0
  %v473 = vmax.f32 %v390, 0.0
  %v474 = vmax.f32 %v439, 0.0
  %v475 = vmax.f32 %v393, 0.0
  %v476 = vmax.f32 %v442, 0.0
  %v477 = vmax.f32 %v395, 0.0
  %v478 = vmax.f32 %v444, 0.0
  %v479 = vmax.f32 %v398, 0.0
  %v480 = vmax.f32 %v447, 0.0
  %v481 = vmax.f32 %v400, 0.0
  %v482 = vmax.f32 %v449, 0.0
  %v483 = vpack.c.bf16 %v453, %v451
  %v484 = vpack.c.bf16 %v454, %v452
  %v485 = vpack.c.bf16 %v457, %v455
  %v486 = vpack.c.bf16 %v458, %v456
  %v487 = vpack.c.bf16 %v461, %v459
  %v488 = vpack.c.bf16 %v462, %v460
  %v489 = vpack.c.bf16 %v465, %v463
  %v490 = vpack.c.bf16 %v466, %v464
  %v491 = vpack.c.bf16 %v469, %v467
  %v492 = vpack.c.bf16 %v470, %v468
  %v493 = vpack.c.bf16 %v473, %v471
  %v494 = vpack.c.bf16 %v474, %v472
  %v495 = vpack.c.bf16 %v477, %v475
  %v496 = vpack.c.bf16 %v478, %v476
  %v497 = vpack.c.bf16 %v481, %v479
  %v498 = vpack.c.bf16 %v482, %v480
  %v499 = vld [vmem:[%s4] sm:$0xf]
  %v500 = vld [vmem:[%s4 + $0x4] sm:$0xf]
  %v501 = vld [vmem:[%s4 + $0x8] sm:$0xf]
  %v502 = vld [vmem:[%s4 + $0xc] sm:$0xf]
  %v503 = vld [vmem:[%s4 + $0x10] sm:$0xf]
  %v504 = vld [vmem:[%s4 + $0x14] sm:$0xf]
  %v505 = vld [vmem:[%s4 + $0x18] sm:$0xf]
  %v506 = vld [vmem:[%s4 + $0x1c] sm:$0xf]
  %v507 = vld [vmem:[%s4 + $0x20] sm:$0xf]
  %v508 = vld [vmem:[%s4 + $0x24] sm:$0xf]
  %v509 = vld [vmem:[%s4 + $0x28] sm:$0xf]
  %v510 = vld [vmem:[%s4 + $0x2c] sm:$0xf]
  %v511 = vld [vmem:[%s4 + $0x30] sm:$0xf]
  %v512 = vld [vmem:[%s4 + $0x34] sm:$0xf]
  %v513 = vld [vmem:[%s4 + $0x38] sm:$0xf]
  %v514 = vld [vmem:[%s4 + $0x3c] sm:$0xf]
  %v515 = vld [vmem:[%s4 + $0x40] sm:$0xf]
  %v516 = vld [vmem:[%s4 + $0x44] sm:$0xf]
  %v517 = vld [vmem:[%s4 + $0x48] sm:$0xf]
  %v518 = vld [vmem:[%s4 + $0x4c] sm:$0xf]
  %v519 = vld [vmem:[%s4 + $0x50] sm:$0xf]
  %v520 = vld [vmem:[%s4 + $0x54] sm:$0xf]
  %v521 = vld [vmem:[%s4 + $0x58] sm:$0xf]
  %v522 = vld [vmem:[%s4 + $0x5c] sm:$0xf]
  %v523 = vld [vmem:[%s4 + $0x60] sm:$0xf]
  %v524 = vld [vmem:[%s4 + $0x64] sm:$0xf]
  %v525 = vld [vmem:[%s4 + $0x68] sm:$0xf]
  %v526 = vld [vmem:[%s4 + $0x6c] sm:$0xf]
  %v527 = vld [vmem:[%s4 + $0x70] sm:$0xf]
  %v528 = vld [vmem:[%s4 + $0x74] sm:$0xf]
  %v529 = vld [vmem:[%s4 + $0x78] sm:$0xf]
  %v530 = vld [vmem:[%s4 + $0x7c] sm:$0xf]
  %v531 = vperm.slane %v120, 1
  %v564 = vunpack.c.l.b16 %v499
  %v565 = vunpack.c.l.b16 %v500
  %v566 = vunpack.c.l.b16 %v501
  %v567 = vunpack.c.l.b16 %v502
  %v568 = vunpack.c.l.b16 %v503
  %v569 = vunpack.c.l.b16 %v504
  %v570 = vunpack.c.l.b16 %v505
  %v571 = vunpack.c.l.b16 %v506
  %v572 = vunpack.c.l.b16 %v507
  %v573 = vunpack.c.l.b16 %v508
  %v574 = vunpack.c.l.b16 %v509
  %v575 = vunpack.c.l.b16 %v510
  %v576 = vunpack.c.l.b16 %v511
  %v577 = vunpack.c.l.b16 %v512
  %v578 = vunpack.c.l.b16 %v513
  %v579 = vunpack.c.l.b16 %v514
  %v580 = vunpack.c.l.b16 %v515
  %v581 = vunpack.c.l.b16 %v516
  %v582 = vunpack.c.l.b16 %v517
  %v583 = vunpack.c.l.b16 %v518
  %v584 = vunpack.c.l.b16 %v519
  %v585 = vunpack.c.l.b16 %v520
  %v586 = vunpack.c.l.b16 %v521
  %v587 = vunpack.c.l.b16 %v522
  %v588 = vunpack.c.l.b16 %v523
  %v589 = vunpack.c.l.b16 %v524
  %v590 = vunpack.c.l.b16 %v525
  %v591 = vunpack.c.l.b16 %v526
  %v592 = vunpack.c.l.b16 %v527
  %v593 = vunpack.c.l.b16 %v528
  %v594 = vunpack.c.l.b16 %v529
  %v595 = vunpack.c.l.b16 %v530
  %v596 = vpack.c.b16 %v565, %v564
  %v597 = vpack.c.b16 %v567, %v566
  %v598 = vpack.c.b16 %v569, %v568
  %v599 = vpack.c.b16 %v571, %v570
  %v600 = vpack.c.b16 %v573, %v572
  %v601 = vpack.c.b16 %v575, %v574
  %v602 = vpack.c.b16 %v577, %v576
  %v603 = vpack.c.b16 %v579, %v578
  %v604 = vpack.c.b16 %v581, %v580
  %v605 = vpack.c.b16 %v583, %v582
  %v606 = vpack.c.b16 %v585, %v584
  %v607 = vpack.c.b16 %v587, %v586
  %v608 = vpack.c.b16 %v589, %v588
  %v609 = vpack.c.b16 %v591, %v590
  %v610 = vpack.c.b16 %v593, %v592
  %v611 = vpack.c.b16 %v595, %v594
  %628 = vmatpush.bf16.msra.mxu0 %v603
  %629 = vmatpush.bf16.msra.mxu0 %v602
  %630 = vmatpush.bf16.msra.mxu0 %v601
  %631 = vmatpush.bf16.msra.mxu0 %v600
  %632 = vmatpush.bf16.msra.mxu0 %v599
  %633 = vmatpush.bf16.msra.mxu0 %v598
  %634 = vmatpush.bf16.msra.mxu0 %v597
  %635 = vmatpush.bf16.msra.mxu0 %v596
  %636 = vmatmul.bf16.gmra.mxu0 %v483
  %v637 = vpop.f32.mrf.mxu0
  %v638 = vadd.f32 %v531, %v637
  %v639 = vpop.f32.mrf.mxu0
  %v640 = vadd.f32 %v531, %v639
  %641 = vmatmul.bf16.gmra.mxu0 %v485
  %v642 = vpop.f32.mrf.mxu0
  %v643 = vadd.f32 %v531, %v642
  %v644 = vpop.f32.mrf.mxu0
  %v645 = vadd.f32 %v531, %v644
  %646 = vmatmul.bf16.gmra.mxu0 %v487
  %v647 = vpop.f32.mrf.mxu0
  %v648 = vadd.f32 %v531, %v647
  %v649 = vpop.f32.mrf.mxu0
  %v650 = vadd.f32 %v531, %v649
  %651 = vmatmul.bf16.gmra.mxu0 %v489
  %v652 = vpop.f32.mrf.mxu0
  %v653 = vadd.f32 %v531, %v652
  %v654 = vpop.f32.mrf.mxu0
  %v655 = vadd.f32 %v531, %v654
  %656 = vmatmul.bf16.gmra.mxu0 %v491
  %v657 = vpop.f32.mrf.mxu0
  %v658 = vadd.f32 %v531, %v657
  %v659 = vpop.f32.mrf.mxu0
  %v660 = vadd.f32 %v531, %v659
  %661 = vmatmul.bf16.gmra.mxu0 %v493
  %v662 = vpop.f32.mrf.mxu0
  %v663 = vadd.f32 %v531, %v662
  %v664 = vpop.f32.mrf.mxu0
  %v665 = vadd.f32 %v531, %v664
  %666 = vmatmul.bf16.gmra.mxu0 %v495
  %v667 = vpop.f32.mrf.mxu0
  %v668 = vadd.f32 %v531, %v667
  %v669 = vpop.f32.mrf.mxu0
  %v670 = vadd.f32 %v531, %v669
  %671 = vmatmul.bf16.gmra.mxu0 %v497
  %v672 = vpop.f32.mrf.mxu0
  %v673 = vadd.f32 %v531, %v672
  %v674 = vpop.f32.mrf.mxu0
  %v675 = vadd.f32 %v531, %v674
  %676 = vdwg.mxu0
  %677 = vmatpush.bf16.msra.mxu0 %v611
  %678 = vmatpush.bf16.msra.mxu0 %v610
  %679 = vmatpush.bf16.msra.mxu0 %v609
  %680 = vmatpush.bf16.msra.mxu0 %v608
  %681 = vmatpush.bf16.msra.mxu0 %v607
  %682 = vmatpush.bf16.msra.mxu0 %v606
  %683 = vmatpush.bf16.msra.mxu0 %v605
  %684 = vmatpush.bf16.msra.mxu0 %v604
  %685 = vmatmul.bf16.gmra.mxu0 %v484
  %v686 = vpop.f32.mrf.mxu0
  %v687 = vadd.f32 %v638, %v686
  %v688 = vpop.f32.mrf.mxu0
  %v689 = vadd.f32 %v640, %v688
  %690 = vmatmul.bf16.gmra.mxu0 %v486
  %v691 = vpop.f32.mrf.mxu0
  %v692 = vadd.f32 %v643, %v691
  %v693 = vpop.f32.mrf.mxu0
  %v694 = vadd.f32 %v645, %v693
  %695 = vmatmul.bf16.gmra.mxu0 %v488
  %v696 = vpop.f32.mrf.mxu0
  %v697 = vadd.f32 %v648, %v696
  %v698 = vpop.f32.mrf.mxu0
  %v699 = vadd.f32 %v650, %v698
  %700 = vmatmul.bf16.gmra.mxu0 %v490
  %v701 = vpop.f32.mrf.mxu0
  %v702 = vadd.f32 %v653, %v701
  %v703 = vpop.f32.mrf.mxu0
  %v704 = vadd.f32 %v655, %v703
  %705 = vmatmul.bf16.gmra.mxu0 %v492
  %v706 = vpop.f32.mrf.mxu0
  %v707 = vadd.f32 %v658, %v706
  %v708 = vpop.f32.mrf.mxu0
  %v709 = vadd.f32 %v660, %v708
  %710 = vmatmul.bf16.gmra.mxu0 %v494
  %v711 = vpop.f32.mrf.mxu0
  %v712 = vadd.f32 %v663, %v711
  %v713 = vpop.f32.mrf.mxu0
  %v714 = vadd.f32 %v665, %v713
  %715 = vmatmul.bf16.gmra.mxu0 %v496
  %v716 = vpop.f32.mrf.mxu0
  %v717 = vadd.f32 %v668, %v716
  %v718 = vpop.f32.mrf.mxu0
  %v719 = vadd.f32 %v670, %v718
  %720 = vmatmul.bf16.gmra.mxu0 %v498
  %v721 = vpop.f32.mrf.mxu0
  %v722 = vadd.f32 %v673, %v721
  %v723 = vpop.f32.mrf.mxu0
  %v724 = vadd.f32 %v675, %v723
  %725 = vdwg.mxu0
  %v726 = vmul.f32 %v687, %v104
  %v727 = vmul.f32 %v689, %v105
  %v728 = vmul.f32 %v692, %v106
  %v729 = vmul.f32 %v694, %v107
  %v730 = vmul.f32 %v697, %v108
  %v731 = vmul.f32 %v699, %v109
  %v732 = vmul.f32 %v702, %v110
  %v733 = vmul.f32 %v704, %v111
  %v734 = vmul.f32 %v707, %v112
  %v735 = vmul.f32 %v709, %v113
  %v736 = vmul.f32 %v712, %v114
  %v737 = vmul.f32 %v714, %v115
  %v738 = vmul.f32 %v717, %v116
  %v739 = vmul.f32 %v719, %v117
  %v740 = vmul.f32 %v722, %v118
  %v741 = vmul.f32 %v724, %v119
  %v742 = vadd.f32 %v726, %v727
  %v743 = vadd.f32 %v742, %v728
  %v744 = vadd.f32 %v743, %v729
  %v745 = vadd.f32 %v744, %v730
  %v746 = vadd.f32 %v745, %v731
  %v747 = vadd.f32 %v746, %v732
  %v748 = vadd.f32 %v747, %v733
  %v749 = vadd.f32 %v748, %v734
  %v750 = vadd.f32 %v749, %v735
  %v751 = vadd.f32 %v750, %v736
  %v752 = vadd.f32 %v751, %v737
  %v753 = vadd.f32 %v752, %v738
  %v754 = vadd.f32 %v753, %v739
  %v755 = vadd.f32 %v754, %v740
  %v756 = vadd.f32 %v755, %v741
  %v757 = vrot.slane %v756, 4
  %v758 = vadd.f32 %v756, %v757
  %v759 = vrot.slane %v758, 2
  %v760 = vadd.f32 %v758, %v759
  %v761 = vrot.slane %v760, 1
  %v762 = vadd.f32 %v760, %v761
  %v763 = vmul.f32 %v762, 0.041666668
  %v764 = vmul.f32 %v726, %v726
  %v765 = vmul.f32 %v727, %v727
  %v766 = vmul.f32 %v728, %v728
  %v767 = vmul.f32 %v729, %v729
  %v768 = vmul.f32 %v730, %v730
  %v769 = vmul.f32 %v731, %v731
  %v770 = vmul.f32 %v732, %v732
  %v771 = vmul.f32 %v733, %v733
  %v772 = vmul.f32 %v734, %v734
  %v773 = vmul.f32 %v735, %v735
  %v774 = vmul.f32 %v736, %v736
  %v775 = vmul.f32 %v737, %v737
  %v776 = vmul.f32 %v738, %v738
  %v777 = vmul.f32 %v739, %v739
  %v778 = vmul.f32 %v740, %v740
  %v779 = vmul.f32 %v741, %v741
  %v780 = vadd.f32 %v764, %v765
  %v781 = vadd.f32 %v780, %v766
  %v782 = vadd.f32 %v781, %v767
  %v783 = vadd.f32 %v782, %v768
  %v784 = vadd.f32 %v783, %v769
  %v785 = vadd.f32 %v784, %v770
  %v786 = vadd.f32 %v785, %v771
  %v787 = vadd.f32 %v786, %v772
  %v788 = vadd.f32 %v787, %v773
  %v789 = vadd.f32 %v788, %v774
  %v790 = vadd.f32 %v789, %v775
  %v791 = vadd.f32 %v790, %v776
  %v792 = vadd.f32 %v791, %v777
  %v793 = vadd.f32 %v792, %v778
  %v794 = vadd.f32 %v793, %v779
  %v795 = vrot.slane %v794, 4
  %v796 = vadd.f32 %v794, %v795
  %v797 = vrot.slane %v796, 2
  %v798 = vadd.f32 %v796, %v797
  %v799 = vrot.slane %v798, 1
  %v800 = vadd.f32 %v798, %v799
  %v801 = vmul.f32 %v800, 0.041666668
  %v802 = vmul.f32 %v763, %v763
  %v803 = vsub.f32 %v801, %v802
  %v804 = vmax.f32 %v803, 0.0
  %v805 = vsub.f32 %v687, %v763
  %v806 = vsub.f32 %v689, %v763
  %v807 = vsub.f32 %v692, %v763
  %v808 = vsub.f32 %v694, %v763
  %v809 = vsub.f32 %v697, %v763
  %v810 = vsub.f32 %v699, %v763
  %v811 = vsub.f32 %v702, %v763
  %v812 = vsub.f32 %v704, %v763
  %v813 = vsub.f32 %v707, %v763
  %v814 = vsub.f32 %v709, %v763
  %v815 = vsub.f32 %v712, %v763
  %v816 = vsub.f32 %v714, %v763
  %v817 = vsub.f32 %v717, %v763
  %v818 = vsub.f32 %v719, %v763
  %v819 = vsub.f32 %v722, %v763
  %v820 = vsub.f32 %v724, %v763
  %v821 = vadd.f32 %v804, 1e-05
  %v822 = vrsqrt.pop %v821
  %v823 = vmul.f32 %v822, %v821
  %v824 = vmul.f32 %v823, %v822
  %v825 = vmul.f32 0.5, %v824
  %v826 = vsub.f32 1.5, %v825
  %v827 = vmul.f32 %v822, %v826
  %vm828 = vweird.f32 %v821
  %vm829 = vweird.f32 %v822
  %vm830 = vmor %vm828, %vm829
  %v831 = vsel %vm830, %v822, %v827
  %v832 = vmul.f32 %v805, %v831
  %v833 = vmul.f32 %v806, %v831
  %v834 = vmul.f32 %v807, %v831
  %v835 = vmul.f32 %v808, %v831
  %v836 = vmul.f32 %v809, %v831
  %v837 = vmul.f32 %v810, %v831
  %v838 = vmul.f32 %v811, %v831
  %v839 = vmul.f32 %v812, %v831
  %v840 = vmul.f32 %v813, %v831
  %v841 = vmul.f32 %v814, %v831
  %v842 = vmul.f32 %v815, %v831
  %v843 = vmul.f32 %v816, %v831
  %v844 = vmul.f32 %v817, %v831
  %v845 = vmul.f32 %v818, %v831
  %v846 = vmul.f32 %v819, %v831
  %v847 = vmul.f32 %v820, %v831
  %v848 = vperm.slane %v120, 2
  %v849 = vmul.f32 %v832, %v848
  %v850 = vmul.f32 %v833, %v848
  %v851 = vmul.f32 %v834, %v848
  %v852 = vmul.f32 %v835, %v848
  %v853 = vmul.f32 %v836, %v848
  %v854 = vmul.f32 %v837, %v848
  %v855 = vmul.f32 %v838, %v848
  %v856 = vmul.f32 %v839, %v848
  %v857 = vmul.f32 %v840, %v848
  %v858 = vmul.f32 %v841, %v848
  %v859 = vmul.f32 %v842, %v848
  %v860 = vmul.f32 %v843, %v848
  %v861 = vmul.f32 %v844, %v848
  %v862 = vmul.f32 %v845, %v848
  %v863 = vmul.f32 %v846, %v848
  %v864 = vmul.f32 %v847, %v848
  %v865 = vperm.slane %v120, 3
  %v866 = vadd.f32 %v849, %v865
  %v867 = vadd.f32 %v850, %v865
  %v868 = vadd.f32 %v851, %v865
  %v869 = vadd.f32 %v852, %v865
  %v870 = vadd.f32 %v853, %v865
  %v871 = vadd.f32 %v854, %v865
  %v872 = vadd.f32 %v855, %v865
  %v873 = vadd.f32 %v856, %v865
  %v874 = vadd.f32 %v857, %v865
  %v875 = vadd.f32 %v858, %v865
  %v876 = vadd.f32 %v859, %v865
  %v877 = vadd.f32 %v860, %v865
  %v878 = vadd.f32 %v861, %v865
  %v879 = vadd.f32 %v862, %v865
  %v880 = vadd.f32 %v863, %v865
  %v881 = vadd.f32 %v864, %v865
  %v882 = vmax.f32 %v866, 0.0
  %v883 = vmax.f32 %v867, 0.0
  %v884 = vmax.f32 %v868, 0.0
  %v885 = vmax.f32 %v869, 0.0
  %v886 = vmax.f32 %v870, 0.0
  %v887 = vmax.f32 %v871, 0.0
  %v888 = vmax.f32 %v872, 0.0
  %v889 = vmax.f32 %v873, 0.0
  %v890 = vmax.f32 %v874, 0.0
  %v891 = vmax.f32 %v875, 0.0
  %v892 = vmax.f32 %v876, 0.0
  %v893 = vmax.f32 %v877, 0.0
  %v894 = vmax.f32 %v878, 0.0
  %v895 = vmax.f32 %v879, 0.0
  %v896 = vmax.f32 %v880, 0.0
  %v897 = vmax.f32 %v881, 0.0
  %s898 = scalar_lea.vmem %s5, 8
  %v899 = vld [vmem:[%s898] sm:$0xff]
  %v900 = vpack.c.bf16 %v883, %v882
  %v901 = vpack.c.bf16 %v885, %v884
  %v902 = vpack.c.bf16 %v887, %v886
  %v903 = vpack.c.bf16 %v889, %v888
  %v904 = vpack.c.bf16 %v891, %v890
  %v905 = vpack.c.bf16 %v893, %v892
  %v906 = vpack.c.bf16 %v895, %v894
  %v907 = vpack.c.bf16 %v897, %v896
  %s908 = scalar_lea.vmem %s2, 128
  %v909 = vld [vmem:[%s908] sm:$0xff]
  %v910 = vld [vmem:[%s908 + $0x8] sm:$0xff]
  %v911 = vld [vmem:[%s908 + $0x10] sm:$0xff]
  %v912 = vld [vmem:[%s908 + $0x18] sm:$0xff]
  %v913 = vld [vmem:[%s908 + $0x20] sm:$0xff]
  %v914 = vld [vmem:[%s908 + $0x28] sm:$0xff]
  %v915 = vld [vmem:[%s908 + $0x30] sm:$0xff]
  %v916 = vld [vmem:[%s908 + $0x38] sm:$0xff]
  %v917 = vld [vmem:[%s908 + $0x40] sm:$0xff]
  %v918 = vld [vmem:[%s908 + $0x48] sm:$0xff]
  %v919 = vld [vmem:[%s908 + $0x50] sm:$0xff]
  %v920 = vld [vmem:[%s908 + $0x58] sm:$0xff]
  %v921 = vld [vmem:[%s908 + $0x60] sm:$0xff]
  %v922 = vld [vmem:[%s908 + $0x68] sm:$0xff]
  %v923 = vld [vmem:[%s908 + $0x70] sm:$0xff]
  %v924 = vld [vmem:[%s908 + $0x78] sm:$0xff]
  %925 = vmatpush.bf16.msra.mxu0 %v907
  %926 = vmatpush.bf16.msra.mxu0 %v906
  %927 = vmatpush.bf16.msra.mxu0 %v905
  %928 = vmatpush.bf16.msra.mxu0 %v904
  %929 = vmatpush.bf16.msra.mxu0 %v903
  %930 = vmatpush.bf16.msra.mxu0 %v902
  %931 = vmatpush.bf16.msra.mxu0 %v901
  %932 = vmatpush.bf16.msra.mxu0 %v900
  %933 = vmatmul.bf16.gmra.mxu0 %v177
  %v934 = vpop.f32.mrf.mxu0
  %v935 = vadd.f32 %v909, %v934
  %v936 = vpop.f32.mrf.mxu0
  %v937 = vadd.f32 %v910, %v936
  %938 = vmatmul.bf16.gmra.mxu0 %v178
  %v939 = vpop.f32.mrf.mxu0
  %v940 = vadd.f32 %v911, %v939
  %v941 = vpop.f32.mrf.mxu0
  %v942 = vadd.f32 %v912, %v941
  %943 = vmatmul.bf16.gmra.mxu0 %v179
  %v944 = vpop.f32.mrf.mxu0
  %v945 = vadd.f32 %v913, %v944
  %v946 = vpop.f32.mrf.mxu0
  %v947 = vadd.f32 %v914, %v946
  %948 = vmatmul.bf16.gmra.mxu0 %v180
  %v949 = vpop.f32.mrf.mxu0
  %v950 = vadd.f32 %v915, %v949
  %v951 = vpop.f32.mrf.mxu0
  %v952 = vadd.f32 %v916, %v951
  %953 = vmatmul.bf16.gmra.mxu0 %v181
  %v954 = vpop.f32.mrf.mxu0
  %v955 = vadd.f32 %v917, %v954
  %v956 = vpop.f32.mrf.mxu0
  %v957 = vadd.f32 %v918, %v956
  %958 = vmatmul.bf16.gmra.mxu0 %v182
  %v959 = vpop.f32.mrf.mxu0
  %v960 = vadd.f32 %v919, %v959
  %v961 = vpop.f32.mrf.mxu0
  %v962 = vadd.f32 %v920, %v961
  %963 = vmatmul.bf16.gmra.mxu0 %v183
  %v964 = vpop.f32.mrf.mxu0
  %v965 = vadd.f32 %v921, %v964
  %v966 = vpop.f32.mrf.mxu0
  %v967 = vadd.f32 %v922, %v966
  %968 = vmatmul.bf16.gmra.mxu0 %v184
  %v969 = vpop.f32.mrf.mxu0
  %v970 = vadd.f32 %v923, %v969
  %v971 = vpop.f32.mrf.mxu0
  %v972 = vadd.f32 %v924, %v971
  %973 = vdwg.mxu0
  %v974 = vpack.c.bf16 %v937, %v935
  %v975 = vpack.c.bf16 %v942, %v940
  %v976 = vpack.c.bf16 %v947, %v945
  %v977 = vpack.c.bf16 %v952, %v950
  %v978 = vpack.c.bf16 %v957, %v955
  %v979 = vpack.c.bf16 %v962, %v960
  %v980 = vpack.c.bf16 %v967, %v965
  %v981 = vpack.c.bf16 %v972, %v970
  %s982 = scalar_lea.vmem %s3, 128
  %v983 = vld [vmem:[%s982] sm:$0xff]
  %v984 = vld [vmem:[%s982 + $0x8] sm:$0xff]
  %v985 = vld [vmem:[%s982 + $0x10] sm:$0xff]
  %v986 = vld [vmem:[%s982 + $0x18] sm:$0xff]
  %v987 = vld [vmem:[%s982 + $0x20] sm:$0xff]
  %v988 = vld [vmem:[%s982 + $0x28] sm:$0xff]
  %v989 = vld [vmem:[%s982 + $0x30] sm:$0xff]
  %v990 = vld [vmem:[%s982 + $0x38] sm:$0xff]
  %v991 = vld [vmem:[%s982 + $0x40] sm:$0xff]
  %v992 = vld [vmem:[%s982 + $0x48] sm:$0xff]
  %v993 = vld [vmem:[%s982 + $0x50] sm:$0xff]
  %v994 = vld [vmem:[%s982 + $0x58] sm:$0xff]
  %v995 = vld [vmem:[%s982 + $0x60] sm:$0xff]
  %v996 = vld [vmem:[%s982 + $0x68] sm:$0xff]
  %v997 = vld [vmem:[%s982 + $0x70] sm:$0xff]
  %v998 = vld [vmem:[%s982 + $0x78] sm:$0xff]
  %v1000 = vperm.slane %v899, 0
  %v1001 = vperm.slane %v899, 4
  %v1004 = vperm.slane %v1000, 0
  %v1005 = vperm.slane %v1001, 0
  %v1022 = vunpack.c.l.b16 %v983
  %v1023 = vunpack.c.h.b16 %v983
  %v1024 = vunpack.c.l.b16 %v984
  %v1025 = vunpack.c.h.b16 %v984
  %v1026 = vunpack.c.l.b16 %v985
  %v1027 = vunpack.c.h.b16 %v985
  %v1028 = vunpack.c.l.b16 %v986
  %v1029 = vunpack.c.h.b16 %v986
  %v1030 = vunpack.c.l.b16 %v987
  %v1031 = vunpack.c.h.b16 %v987
  %v1032 = vunpack.c.l.b16 %v988
  %v1033 = vunpack.c.h.b16 %v988
  %v1034 = vunpack.c.l.b16 %v989
  %v1035 = vunpack.c.h.b16 %v989
  %v1036 = vunpack.c.l.b16 %v990
  %v1037 = vunpack.c.h.b16 %v990
  %v1038 = vunpack.c.l.b16 %v991
  %v1039 = vunpack.c.h.b16 %v991
  %v1040 = vunpack.c.l.b16 %v992
  %v1041 = vunpack.c.h.b16 %v992
  %v1042 = vunpack.c.l.b16 %v993
  %v1043 = vunpack.c.h.b16 %v993
  %v1044 = vunpack.c.l.b16 %v994
  %v1045 = vunpack.c.h.b16 %v994
  %v1046 = vunpack.c.l.b16 %v995
  %v1047 = vunpack.c.h.b16 %v995
  %v1048 = vunpack.c.l.b16 %v996
  %v1049 = vunpack.c.h.b16 %v996
  %v1050 = vunpack.c.l.b16 %v997
  %v1051 = vunpack.c.h.b16 %v997
  %v1052 = vunpack.c.l.b16 %v998
  %v1053 = vunpack.c.h.b16 %v998
  %v1054 = vpack.c.b16 %v1024, %v1022
  %v1055 = vpack.c.b16 %v1025, %v1023
  %v1056 = vpack.c.b16 %v1028, %v1026
  %v1057 = vpack.c.b16 %v1029, %v1027
  %v1058 = vpack.c.b16 %v1032, %v1030
  %v1059 = vpack.c.b16 %v1033, %v1031
  %v1060 = vpack.c.b16 %v1036, %v1034
  %v1061 = vpack.c.b16 %v1037, %v1035
  %v1062 = vpack.c.b16 %v1040, %v1038
  %v1063 = vpack.c.b16 %v1041, %v1039
  %v1064 = vpack.c.b16 %v1044, %v1042
  %v1065 = vpack.c.b16 %v1045, %v1043
  %v1066 = vpack.c.b16 %v1048, %v1046
  %v1067 = vpack.c.b16 %v1049, %v1047
  %v1068 = vpack.c.b16 %v1052, %v1050
  %v1069 = vpack.c.b16 %v1053, %v1051
  %1086 = vmatpush.bf16.msra.mxu0 %v1068
  %1087 = vmatpush.bf16.msra.mxu0 %v1066
  %1088 = vmatpush.bf16.msra.mxu0 %v1064
  %1089 = vmatpush.bf16.msra.mxu0 %v1062
  %1090 = vmatpush.bf16.msra.mxu0 %v1060
  %1091 = vmatpush.bf16.msra.mxu0 %v1058
  %1092 = vmatpush.bf16.msra.mxu0 %v1056
  %1093 = vmatpush.bf16.msra.mxu0 %v1054
  %1094 = vmatmul.bf16.gmra.mxu0 %v974
  %v1095 = vpop.f32.mrf.mxu0
  %v1096 = vadd.f32 %v1004, %v1095
  %v1097 = vpop.f32.mrf.mxu0
  %v1098 = vadd.f32 %v1004, %v1097
  %1099 = vmatmul.bf16.gmra.mxu0 %v975
  %v1100 = vpop.f32.mrf.mxu0
  %v1101 = vadd.f32 %v1004, %v1100
  %v1102 = vpop.f32.mrf.mxu0
  %v1103 = vadd.f32 %v1004, %v1102
  %1104 = vmatmul.bf16.gmra.mxu0 %v976
  %v1105 = vpop.f32.mrf.mxu0
  %v1106 = vadd.f32 %v1004, %v1105
  %v1107 = vpop.f32.mrf.mxu0
  %v1108 = vadd.f32 %v1004, %v1107
  %1109 = vmatmul.bf16.gmra.mxu0 %v977
  %v1110 = vpop.f32.mrf.mxu0
  %v1111 = vadd.f32 %v1004, %v1110
  %v1112 = vpop.f32.mrf.mxu0
  %v1113 = vadd.f32 %v1004, %v1112
  %1114 = vmatmul.bf16.gmra.mxu0 %v978
  %v1115 = vpop.f32.mrf.mxu0
  %v1116 = vadd.f32 %v1004, %v1115
  %v1117 = vpop.f32.mrf.mxu0
  %v1118 = vadd.f32 %v1004, %v1117
  %1119 = vmatmul.bf16.gmra.mxu0 %v979
  %v1120 = vpop.f32.mrf.mxu0
  %v1121 = vadd.f32 %v1004, %v1120
  %v1122 = vpop.f32.mrf.mxu0
  %v1123 = vadd.f32 %v1004, %v1122
  %1124 = vmatmul.bf16.gmra.mxu0 %v980
  %v1125 = vpop.f32.mrf.mxu0
  %v1126 = vadd.f32 %v1004, %v1125
  %v1127 = vpop.f32.mrf.mxu0
  %v1128 = vadd.f32 %v1004, %v1127
  %1129 = vmatmul.bf16.gmra.mxu0 %v981
  %v1130 = vpop.f32.mrf.mxu0
  %v1131 = vadd.f32 %v1004, %v1130
  %v1132 = vpop.f32.mrf.mxu0
  %v1133 = vadd.f32 %v1004, %v1132
  %1134 = vdwg.mxu0
  %1135 = vmatpush.bf16.msra.mxu0 %v1069
  %1136 = vmatpush.bf16.msra.mxu0 %v1067
  %1137 = vmatpush.bf16.msra.mxu0 %v1065
  %1138 = vmatpush.bf16.msra.mxu0 %v1063
  %1139 = vmatpush.bf16.msra.mxu0 %v1061
  %1140 = vmatpush.bf16.msra.mxu0 %v1059
  %1141 = vmatpush.bf16.msra.mxu0 %v1057
  %1142 = vmatpush.bf16.msra.mxu0 %v1055
  %1143 = vmatmul.bf16.gmra.mxu0 %v974
  %v1144 = vpop.f32.mrf.mxu0
  %v1145 = vadd.f32 %v1005, %v1144
  %v1146 = vpop.f32.mrf.mxu0
  %v1147 = vadd.f32 %v1005, %v1146
  %1148 = vmatmul.bf16.gmra.mxu0 %v975
  %v1149 = vpop.f32.mrf.mxu0
  %v1150 = vadd.f32 %v1005, %v1149
  %v1151 = vpop.f32.mrf.mxu0
  %v1152 = vadd.f32 %v1005, %v1151
  %1153 = vmatmul.bf16.gmra.mxu0 %v976
  %v1154 = vpop.f32.mrf.mxu0
  %v1155 = vadd.f32 %v1005, %v1154
  %v1156 = vpop.f32.mrf.mxu0
  %v1157 = vadd.f32 %v1005, %v1156
  %1158 = vmatmul.bf16.gmra.mxu0 %v977
  %v1159 = vpop.f32.mrf.mxu0
  %v1160 = vadd.f32 %v1005, %v1159
  %v1161 = vpop.f32.mrf.mxu0
  %v1162 = vadd.f32 %v1005, %v1161
  %1163 = vmatmul.bf16.gmra.mxu0 %v978
  %v1164 = vpop.f32.mrf.mxu0
  %v1165 = vadd.f32 %v1005, %v1164
  %v1166 = vpop.f32.mrf.mxu0
  %v1167 = vadd.f32 %v1005, %v1166
  %1168 = vmatmul.bf16.gmra.mxu0 %v979
  %v1169 = vpop.f32.mrf.mxu0
  %v1170 = vadd.f32 %v1005, %v1169
  %v1171 = vpop.f32.mrf.mxu0
  %v1172 = vadd.f32 %v1005, %v1171
  %1173 = vmatmul.bf16.gmra.mxu0 %v980
  %v1174 = vpop.f32.mrf.mxu0
  %v1175 = vadd.f32 %v1005, %v1174
  %v1176 = vpop.f32.mrf.mxu0
  %v1177 = vadd.f32 %v1005, %v1176
  %1178 = vmatmul.bf16.gmra.mxu0 %v981
  %v1179 = vpop.f32.mrf.mxu0
  %v1180 = vadd.f32 %v1005, %v1179
  %v1181 = vpop.f32.mrf.mxu0
  %v1182 = vadd.f32 %v1005, %v1181
  %1183 = vdwg.mxu0
  %v1184 = vmax.f32 %v1096, 0.0
  %v1185 = vmax.f32 %v1145, 0.0
  %v1186 = vmax.f32 %v1098, 0.0
  %v1187 = vmax.f32 %v1147, 0.0
  %v1188 = vmax.f32 %v1101, 0.0
  %v1189 = vmax.f32 %v1150, 0.0
  %v1190 = vmax.f32 %v1103, 0.0
  %v1191 = vmax.f32 %v1152, 0.0
  %v1192 = vmax.f32 %v1106, 0.0
  %v1193 = vmax.f32 %v1155, 0.0
  %v1194 = vmax.f32 %v1108, 0.0
  %v1195 = vmax.f32 %v1157, 0.0
  %v1196 = vmax.f32 %v1111, 0.0
  %v1197 = vmax.f32 %v1160, 0.0
  %v1198 = vmax.f32 %v1113, 0.0
  %v1199 = vmax.f32 %v1162, 0.0
  %v1200 = vmax.f32 %v1116, 0.0
  %v1201 = vmax.f32 %v1165, 0.0
  %v1202 = vmax.f32 %v1118, 0.0
  %v1203 = vmax.f32 %v1167, 0.0
  %v1204 = vmax.f32 %v1121, 0.0
  %v1205 = vmax.f32 %v1170, 0.0
  %v1206 = vmax.f32 %v1123, 0.0
  %v1207 = vmax.f32 %v1172, 0.0
  %v1208 = vmax.f32 %v1126, 0.0
  %v1209 = vmax.f32 %v1175, 0.0
  %v1210 = vmax.f32 %v1128, 0.0
  %v1211 = vmax.f32 %v1177, 0.0
  %v1212 = vmax.f32 %v1131, 0.0
  %v1213 = vmax.f32 %v1180, 0.0
  %v1214 = vmax.f32 %v1133, 0.0
  %v1215 = vmax.f32 %v1182, 0.0
  %v1216 = vpack.c.bf16 %v1186, %v1184
  %v1217 = vpack.c.bf16 %v1187, %v1185
  %v1218 = vpack.c.bf16 %v1190, %v1188
  %v1219 = vpack.c.bf16 %v1191, %v1189
  %v1220 = vpack.c.bf16 %v1194, %v1192
  %v1221 = vpack.c.bf16 %v1195, %v1193
  %v1222 = vpack.c.bf16 %v1198, %v1196
  %v1223 = vpack.c.bf16 %v1199, %v1197
  %v1224 = vpack.c.bf16 %v1202, %v1200
  %v1225 = vpack.c.bf16 %v1203, %v1201
  %v1226 = vpack.c.bf16 %v1206, %v1204
  %v1227 = vpack.c.bf16 %v1207, %v1205
  %v1228 = vpack.c.bf16 %v1210, %v1208
  %v1229 = vpack.c.bf16 %v1211, %v1209
  %v1230 = vpack.c.bf16 %v1214, %v1212
  %v1231 = vpack.c.bf16 %v1215, %v1213
  %s1232 = scalar_lea.vmem %s4, 128
  %v1233 = vld [vmem:[%s1232] sm:$0xf]
  %v1234 = vld [vmem:[%s1232 + $0x4] sm:$0xf]
  %v1235 = vld [vmem:[%s1232 + $0x8] sm:$0xf]
  %v1236 = vld [vmem:[%s1232 + $0xc] sm:$0xf]
  %v1237 = vld [vmem:[%s1232 + $0x10] sm:$0xf]
  %v1238 = vld [vmem:[%s1232 + $0x14] sm:$0xf]
  %v1239 = vld [vmem:[%s1232 + $0x18] sm:$0xf]
  %v1240 = vld [vmem:[%s1232 + $0x1c] sm:$0xf]
  %v1241 = vld [vmem:[%s1232 + $0x20] sm:$0xf]
  %v1242 = vld [vmem:[%s1232 + $0x24] sm:$0xf]
  %v1243 = vld [vmem:[%s1232 + $0x28] sm:$0xf]
  %v1244 = vld [vmem:[%s1232 + $0x2c] sm:$0xf]
  %v1245 = vld [vmem:[%s1232 + $0x30] sm:$0xf]
  %v1246 = vld [vmem:[%s1232 + $0x34] sm:$0xf]
  %v1247 = vld [vmem:[%s1232 + $0x38] sm:$0xf]
  %v1248 = vld [vmem:[%s1232 + $0x3c] sm:$0xf]
  %v1249 = vld [vmem:[%s1232 + $0x40] sm:$0xf]
  %v1250 = vld [vmem:[%s1232 + $0x44] sm:$0xf]
  %v1251 = vld [vmem:[%s1232 + $0x48] sm:$0xf]
  %v1252 = vld [vmem:[%s1232 + $0x4c] sm:$0xf]
  %v1253 = vld [vmem:[%s1232 + $0x50] sm:$0xf]
  %v1254 = vld [vmem:[%s1232 + $0x54] sm:$0xf]
  %v1255 = vld [vmem:[%s1232 + $0x58] sm:$0xf]
  %v1256 = vld [vmem:[%s1232 + $0x5c] sm:$0xf]
  %v1257 = vld [vmem:[%s1232 + $0x60] sm:$0xf]
  %v1258 = vld [vmem:[%s1232 + $0x64] sm:$0xf]
  %v1259 = vld [vmem:[%s1232 + $0x68] sm:$0xf]
  %v1260 = vld [vmem:[%s1232 + $0x6c] sm:$0xf]
  %v1261 = vld [vmem:[%s1232 + $0x70] sm:$0xf]
  %v1262 = vld [vmem:[%s1232 + $0x74] sm:$0xf]
  %v1263 = vld [vmem:[%s1232 + $0x78] sm:$0xf]
  %v1264 = vld [vmem:[%s1232 + $0x7c] sm:$0xf]
  %v1265 = vperm.slane %v899, 1
  %v1298 = vunpack.c.l.b16 %v1233
  %v1299 = vunpack.c.l.b16 %v1234
  %v1300 = vunpack.c.l.b16 %v1235
  %v1301 = vunpack.c.l.b16 %v1236
  %v1302 = vunpack.c.l.b16 %v1237
  %v1303 = vunpack.c.l.b16 %v1238
  %v1304 = vunpack.c.l.b16 %v1239
  %v1305 = vunpack.c.l.b16 %v1240
  %v1306 = vunpack.c.l.b16 %v1241
  %v1307 = vunpack.c.l.b16 %v1242
  %v1308 = vunpack.c.l.b16 %v1243
  %v1309 = vunpack.c.l.b16 %v1244
  %v1310 = vunpack.c.l.b16 %v1245
  %v1311 = vunpack.c.l.b16 %v1246
  %v1312 = vunpack.c.l.b16 %v1247
  %v1313 = vunpack.c.l.b16 %v1248
  %v1314 = vunpack.c.l.b16 %v1249
  %v1315 = vunpack.c.l.b16 %v1250
  %v1316 = vunpack.c.l.b16 %v1251
  %v1317 = vunpack.c.l.b16 %v1252
  %v1318 = vunpack.c.l.b16 %v1253
  %v1319 = vunpack.c.l.b16 %v1254
  %v1320 = vunpack.c.l.b16 %v1255
  %v1321 = vunpack.c.l.b16 %v1256
  %v1322 = vunpack.c.l.b16 %v1257
  %v1323 = vunpack.c.l.b16 %v1258
  %v1324 = vunpack.c.l.b16 %v1259
  %v1325 = vunpack.c.l.b16 %v1260
  %v1326 = vunpack.c.l.b16 %v1261
  %v1327 = vunpack.c.l.b16 %v1262
  %v1328 = vunpack.c.l.b16 %v1263
  %v1329 = vunpack.c.l.b16 %v1264
  %v1330 = vpack.c.b16 %v1299, %v1298
  %v1331 = vpack.c.b16 %v1301, %v1300
  %v1332 = vpack.c.b16 %v1303, %v1302
  %v1333 = vpack.c.b16 %v1305, %v1304
  %v1334 = vpack.c.b16 %v1307, %v1306
  %v1335 = vpack.c.b16 %v1309, %v1308
  %v1336 = vpack.c.b16 %v1311, %v1310
  %v1337 = vpack.c.b16 %v1313, %v1312
  %v1338 = vpack.c.b16 %v1315, %v1314
  %v1339 = vpack.c.b16 %v1317, %v1316
  %v1340 = vpack.c.b16 %v1319, %v1318
  %v1341 = vpack.c.b16 %v1321, %v1320
  %v1342 = vpack.c.b16 %v1323, %v1322
  %v1343 = vpack.c.b16 %v1325, %v1324
  %v1344 = vpack.c.b16 %v1327, %v1326
  %v1345 = vpack.c.b16 %v1329, %v1328
  %1362 = vmatpush.bf16.msra.mxu0 %v1337
  %1363 = vmatpush.bf16.msra.mxu0 %v1336
  %1364 = vmatpush.bf16.msra.mxu0 %v1335
  %1365 = vmatpush.bf16.msra.mxu0 %v1334
  %1366 = vmatpush.bf16.msra.mxu0 %v1333
  %1367 = vmatpush.bf16.msra.mxu0 %v1332
  %1368 = vmatpush.bf16.msra.mxu0 %v1331
  %1369 = vmatpush.bf16.msra.mxu0 %v1330
  %1370 = vmatmul.bf16.gmra.mxu0 %v1216
  %v1371 = vpop.f32.mrf.mxu0
  %v1372 = vadd.f32 %v1265, %v1371
  %v1373 = vpop.f32.mrf.mxu0
  %v1374 = vadd.f32 %v1265, %v1373
  %1375 = vmatmul.bf16.gmra.mxu0 %v1218
  %v1376 = vpop.f32.mrf.mxu0
  %v1377 = vadd.f32 %v1265, %v1376
  %v1378 = vpop.f32.mrf.mxu0
  %v1379 = vadd.f32 %v1265, %v1378
  %1380 = vmatmul.bf16.gmra.mxu0 %v1220
  %v1381 = vpop.f32.mrf.mxu0
  %v1382 = vadd.f32 %v1265, %v1381
  %v1383 = vpop.f32.mrf.mxu0
  %v1384 = vadd.f32 %v1265, %v1383
  %1385 = vmatmul.bf16.gmra.mxu0 %v1222
  %v1386 = vpop.f32.mrf.mxu0
  %v1387 = vadd.f32 %v1265, %v1386
  %v1388 = vpop.f32.mrf.mxu0
  %v1389 = vadd.f32 %v1265, %v1388
  %1390 = vmatmul.bf16.gmra.mxu0 %v1224
  %v1391 = vpop.f32.mrf.mxu0
  %v1392 = vadd.f32 %v1265, %v1391
  %v1393 = vpop.f32.mrf.mxu0
  %v1394 = vadd.f32 %v1265, %v1393
  %1395 = vmatmul.bf16.gmra.mxu0 %v1226
  %v1396 = vpop.f32.mrf.mxu0
  %v1397 = vadd.f32 %v1265, %v1396
  %v1398 = vpop.f32.mrf.mxu0
  %v1399 = vadd.f32 %v1265, %v1398
  %1400 = vmatmul.bf16.gmra.mxu0 %v1228
  %v1401 = vpop.f32.mrf.mxu0
  %v1402 = vadd.f32 %v1265, %v1401
  %v1403 = vpop.f32.mrf.mxu0
  %v1404 = vadd.f32 %v1265, %v1403
  %1405 = vmatmul.bf16.gmra.mxu0 %v1230
  %v1406 = vpop.f32.mrf.mxu0
  %v1407 = vadd.f32 %v1265, %v1406
  %v1408 = vpop.f32.mrf.mxu0
  %v1409 = vadd.f32 %v1265, %v1408
  %1410 = vdwg.mxu0
  %1411 = vmatpush.bf16.msra.mxu0 %v1345
  %1412 = vmatpush.bf16.msra.mxu0 %v1344
  %1413 = vmatpush.bf16.msra.mxu0 %v1343
  %1414 = vmatpush.bf16.msra.mxu0 %v1342
  %1415 = vmatpush.bf16.msra.mxu0 %v1341
  %1416 = vmatpush.bf16.msra.mxu0 %v1340
  %1417 = vmatpush.bf16.msra.mxu0 %v1339
  %1418 = vmatpush.bf16.msra.mxu0 %v1338
  %1419 = vmatmul.bf16.gmra.mxu0 %v1217
  %v1420 = vpop.f32.mrf.mxu0
  %v1421 = vadd.f32 %v1372, %v1420
  %v1422 = vpop.f32.mrf.mxu0
  %v1423 = vadd.f32 %v1374, %v1422
  %1424 = vmatmul.bf16.gmra.mxu0 %v1219
  %v1425 = vpop.f32.mrf.mxu0
  %v1426 = vadd.f32 %v1377, %v1425
  %v1427 = vpop.f32.mrf.mxu0
  %v1428 = vadd.f32 %v1379, %v1427
  %1429 = vmatmul.bf16.gmra.mxu0 %v1221
  %v1430 = vpop.f32.mrf.mxu0
  %v1431 = vadd.f32 %v1382, %v1430
  %v1432 = vpop.f32.mrf.mxu0
  %v1433 = vadd.f32 %v1384, %v1432
  %1434 = vmatmul.bf16.gmra.mxu0 %v1223
  %v1435 = vpop.f32.mrf.mxu0
  %v1436 = vadd.f32 %v1387, %v1435
  %v1437 = vpop.f32.mrf.mxu0
  %v1438 = vadd.f32 %v1389, %v1437
  %1439 = vmatmul.bf16.gmra.mxu0 %v1225
  %v1440 = vpop.f32.mrf.mxu0
  %v1441 = vadd.f32 %v1392, %v1440
  %v1442 = vpop.f32.mrf.mxu0
  %v1443 = vadd.f32 %v1394, %v1442
  %1444 = vmatmul.bf16.gmra.mxu0 %v1227
  %v1445 = vpop.f32.mrf.mxu0
  %v1446 = vadd.f32 %v1397, %v1445
  %v1447 = vpop.f32.mrf.mxu0
  %v1448 = vadd.f32 %v1399, %v1447
  %1449 = vmatmul.bf16.gmra.mxu0 %v1229
  %v1450 = vpop.f32.mrf.mxu0
  %v1451 = vadd.f32 %v1402, %v1450
  %v1452 = vpop.f32.mrf.mxu0
  %v1453 = vadd.f32 %v1404, %v1452
  %1454 = vmatmul.bf16.gmra.mxu0 %v1231
  %v1455 = vpop.f32.mrf.mxu0
  %v1456 = vadd.f32 %v1407, %v1455
  %v1457 = vpop.f32.mrf.mxu0
  %v1458 = vadd.f32 %v1409, %v1457
  %1459 = vdwg.mxu0
  %v1460 = vmul.f32 %v1421, %v104
  %v1461 = vmul.f32 %v1423, %v105
  %v1462 = vmul.f32 %v1426, %v106
  %v1463 = vmul.f32 %v1428, %v107
  %v1464 = vmul.f32 %v1431, %v108
  %v1465 = vmul.f32 %v1433, %v109
  %v1466 = vmul.f32 %v1436, %v110
  %v1467 = vmul.f32 %v1438, %v111
  %v1468 = vmul.f32 %v1441, %v112
  %v1469 = vmul.f32 %v1443, %v113
  %v1470 = vmul.f32 %v1446, %v114
  %v1471 = vmul.f32 %v1448, %v115
  %v1472 = vmul.f32 %v1451, %v116
  %v1473 = vmul.f32 %v1453, %v117
  %v1474 = vmul.f32 %v1456, %v118
  %v1475 = vmul.f32 %v1458, %v119
  %v1476 = vadd.f32 %v1460, %v1461
  %v1477 = vadd.f32 %v1476, %v1462
  %v1478 = vadd.f32 %v1477, %v1463
  %v1479 = vadd.f32 %v1478, %v1464
  %v1480 = vadd.f32 %v1479, %v1465
  %v1481 = vadd.f32 %v1480, %v1466
  %v1482 = vadd.f32 %v1481, %v1467
  %v1483 = vadd.f32 %v1482, %v1468
  %v1484 = vadd.f32 %v1483, %v1469
  %v1485 = vadd.f32 %v1484, %v1470
  %v1486 = vadd.f32 %v1485, %v1471
  %v1487 = vadd.f32 %v1486, %v1472
  %v1488 = vadd.f32 %v1487, %v1473
  %v1489 = vadd.f32 %v1488, %v1474
  %v1490 = vadd.f32 %v1489, %v1475
  %v1491 = vrot.slane %v1490, 4
  %v1492 = vadd.f32 %v1490, %v1491
  %v1493 = vrot.slane %v1492, 2
  %v1494 = vadd.f32 %v1492, %v1493
  %v1495 = vrot.slane %v1494, 1
  %v1496 = vadd.f32 %v1494, %v1495
  %v1497 = vmul.f32 %v1496, 0.041666668
  %v1498 = vmul.f32 %v1460, %v1460
  %v1499 = vmul.f32 %v1461, %v1461
  %v1500 = vmul.f32 %v1462, %v1462
  %v1501 = vmul.f32 %v1463, %v1463
  %v1502 = vmul.f32 %v1464, %v1464
  %v1503 = vmul.f32 %v1465, %v1465
  %v1504 = vmul.f32 %v1466, %v1466
  %v1505 = vmul.f32 %v1467, %v1467
  %v1506 = vmul.f32 %v1468, %v1468
  %v1507 = vmul.f32 %v1469, %v1469
  %v1508 = vmul.f32 %v1470, %v1470
  %v1509 = vmul.f32 %v1471, %v1471
  %v1510 = vmul.f32 %v1472, %v1472
  %v1511 = vmul.f32 %v1473, %v1473
  %v1512 = vmul.f32 %v1474, %v1474
  %v1513 = vmul.f32 %v1475, %v1475
  %v1514 = vadd.f32 %v1498, %v1499
  %v1515 = vadd.f32 %v1514, %v1500
  %v1516 = vadd.f32 %v1515, %v1501
  %v1517 = vadd.f32 %v1516, %v1502
  %v1518 = vadd.f32 %v1517, %v1503
  %v1519 = vadd.f32 %v1518, %v1504
  %v1520 = vadd.f32 %v1519, %v1505
  %v1521 = vadd.f32 %v1520, %v1506
  %v1522 = vadd.f32 %v1521, %v1507
  %v1523 = vadd.f32 %v1522, %v1508
  %v1524 = vadd.f32 %v1523, %v1509
  %v1525 = vadd.f32 %v1524, %v1510
  %v1526 = vadd.f32 %v1525, %v1511
  %v1527 = vadd.f32 %v1526, %v1512
  %v1528 = vadd.f32 %v1527, %v1513
  %v1529 = vrot.slane %v1528, 4
  %v1530 = vadd.f32 %v1528, %v1529
  %v1531 = vrot.slane %v1530, 2
  %v1532 = vadd.f32 %v1530, %v1531
  %v1533 = vrot.slane %v1532, 1
  %v1534 = vadd.f32 %v1532, %v1533
  %v1535 = vmul.f32 %v1534, 0.041666668
  %v1536 = vmul.f32 %v1497, %v1497
  %v1537 = vsub.f32 %v1535, %v1536
  %v1538 = vmax.f32 %v1537, 0.0
  %v1539 = vsub.f32 %v1421, %v1497
  %v1540 = vsub.f32 %v1423, %v1497
  %v1541 = vsub.f32 %v1426, %v1497
  %v1542 = vsub.f32 %v1428, %v1497
  %v1543 = vsub.f32 %v1431, %v1497
  %v1544 = vsub.f32 %v1433, %v1497
  %v1545 = vsub.f32 %v1436, %v1497
  %v1546 = vsub.f32 %v1438, %v1497
  %v1547 = vsub.f32 %v1441, %v1497
  %v1548 = vsub.f32 %v1443, %v1497
  %v1549 = vsub.f32 %v1446, %v1497
  %v1550 = vsub.f32 %v1448, %v1497
  %v1551 = vsub.f32 %v1451, %v1497
  %v1552 = vsub.f32 %v1453, %v1497
  %v1553 = vsub.f32 %v1456, %v1497
  %v1554 = vsub.f32 %v1458, %v1497
  %v1555 = vadd.f32 %v1538, 1e-05
  %v1556 = vrsqrt.pop %v1555
  %v1557 = vmul.f32 %v1556, %v1555
  %v1558 = vmul.f32 %v1557, %v1556
  %v1559 = vmul.f32 0.5, %v1558
  %v1560 = vsub.f32 1.5, %v1559
  %v1561 = vmul.f32 %v1556, %v1560
  %vm1562 = vweird.f32 %v1555
  %vm1563 = vweird.f32 %v1556
  %vm1564 = vmor %vm1562, %vm1563
  %v1565 = vsel %vm1564, %v1556, %v1561
  %v1566 = vmul.f32 %v1539, %v1565
  %v1567 = vmul.f32 %v1540, %v1565
  %v1568 = vmul.f32 %v1541, %v1565
  %v1569 = vmul.f32 %v1542, %v1565
  %v1570 = vmul.f32 %v1543, %v1565
  %v1571 = vmul.f32 %v1544, %v1565
  %v1572 = vmul.f32 %v1545, %v1565
  %v1573 = vmul.f32 %v1546, %v1565
  %v1574 = vmul.f32 %v1547, %v1565
  %v1575 = vmul.f32 %v1548, %v1565
  %v1576 = vmul.f32 %v1549, %v1565
  %v1577 = vmul.f32 %v1550, %v1565
  %v1578 = vmul.f32 %v1551, %v1565
  %v1579 = vmul.f32 %v1552, %v1565
  %v1580 = vmul.f32 %v1553, %v1565
  %v1581 = vmul.f32 %v1554, %v1565
  %v1582 = vperm.slane %v899, 2
  %v1583 = vmul.f32 %v1566, %v1582
  %v1584 = vmul.f32 %v1567, %v1582
  %v1585 = vmul.f32 %v1568, %v1582
  %v1586 = vmul.f32 %v1569, %v1582
  %v1587 = vmul.f32 %v1570, %v1582
  %v1588 = vmul.f32 %v1571, %v1582
  %v1589 = vmul.f32 %v1572, %v1582
  %v1590 = vmul.f32 %v1573, %v1582
  %v1591 = vmul.f32 %v1574, %v1582
  %v1592 = vmul.f32 %v1575, %v1582
  %v1593 = vmul.f32 %v1576, %v1582
  %v1594 = vmul.f32 %v1577, %v1582
  %v1595 = vmul.f32 %v1578, %v1582
  %v1596 = vmul.f32 %v1579, %v1582
  %v1597 = vmul.f32 %v1580, %v1582
  %v1598 = vmul.f32 %v1581, %v1582
  %v1599 = vperm.slane %v899, 3
  %v1600 = vadd.f32 %v1583, %v1599
  %v1601 = vadd.f32 %v1584, %v1599
  %v1602 = vadd.f32 %v1585, %v1599
  %v1603 = vadd.f32 %v1586, %v1599
  %v1604 = vadd.f32 %v1587, %v1599
  %v1605 = vadd.f32 %v1588, %v1599
  %v1606 = vadd.f32 %v1589, %v1599
  %v1607 = vadd.f32 %v1590, %v1599
  %v1608 = vadd.f32 %v1591, %v1599
  %v1609 = vadd.f32 %v1592, %v1599
  %v1610 = vadd.f32 %v1593, %v1599
  %v1611 = vadd.f32 %v1594, %v1599
  %v1612 = vadd.f32 %v1595, %v1599
  %v1613 = vadd.f32 %v1596, %v1599
  %v1614 = vadd.f32 %v1597, %v1599
  %v1615 = vadd.f32 %v1598, %v1599
  %v1616 = vmax.f32 %v1600, 0.0
  %v1617 = vmax.f32 %v1601, 0.0
  %v1618 = vmax.f32 %v1602, 0.0
  %v1619 = vmax.f32 %v1603, 0.0
  %v1620 = vmax.f32 %v1604, 0.0
  %v1621 = vmax.f32 %v1605, 0.0
  %v1622 = vmax.f32 %v1606, 0.0
  %v1623 = vmax.f32 %v1607, 0.0
  %v1624 = vmax.f32 %v1608, 0.0
  %v1625 = vmax.f32 %v1609, 0.0
  %v1626 = vmax.f32 %v1610, 0.0
  %v1627 = vmax.f32 %v1611, 0.0
  %v1628 = vmax.f32 %v1612, 0.0
  %v1629 = vmax.f32 %v1613, 0.0
  %v1630 = vmax.f32 %v1614, 0.0
  %v1631 = vmax.f32 %v1615, 0.0
  %s1632 = scalar_lea.vmem %s5, 16
  %v1633 = vld [vmem:[%s1632] sm:$0xff]
  %v1634 = vpack.c.bf16 %v1617, %v1616
  %v1635 = vpack.c.bf16 %v1619, %v1618
  %v1636 = vpack.c.bf16 %v1621, %v1620
  %v1637 = vpack.c.bf16 %v1623, %v1622
  %v1638 = vpack.c.bf16 %v1625, %v1624
  %v1639 = vpack.c.bf16 %v1627, %v1626
  %v1640 = vpack.c.bf16 %v1629, %v1628
  %v1641 = vpack.c.bf16 %v1631, %v1630
  %s1642 = scalar_lea.vmem %s2, 256
  %v1643 = vld [vmem:[%s1642] sm:$0xff]
  %v1644 = vld [vmem:[%s1642 + $0x8] sm:$0xff]
  %v1645 = vld [vmem:[%s1642 + $0x10] sm:$0xff]
  %v1646 = vld [vmem:[%s1642 + $0x18] sm:$0xff]
  %v1647 = vld [vmem:[%s1642 + $0x20] sm:$0xff]
  %v1648 = vld [vmem:[%s1642 + $0x28] sm:$0xff]
  %v1649 = vld [vmem:[%s1642 + $0x30] sm:$0xff]
  %v1650 = vld [vmem:[%s1642 + $0x38] sm:$0xff]
  %v1651 = vld [vmem:[%s1642 + $0x40] sm:$0xff]
  %v1652 = vld [vmem:[%s1642 + $0x48] sm:$0xff]
  %v1653 = vld [vmem:[%s1642 + $0x50] sm:$0xff]
  %v1654 = vld [vmem:[%s1642 + $0x58] sm:$0xff]
  %v1655 = vld [vmem:[%s1642 + $0x60] sm:$0xff]
  %v1656 = vld [vmem:[%s1642 + $0x68] sm:$0xff]
  %v1657 = vld [vmem:[%s1642 + $0x70] sm:$0xff]
  %v1658 = vld [vmem:[%s1642 + $0x78] sm:$0xff]
  %1659 = vmatpush.bf16.msra.mxu0 %v1641
  %1660 = vmatpush.bf16.msra.mxu0 %v1640
  %1661 = vmatpush.bf16.msra.mxu0 %v1639
  %1662 = vmatpush.bf16.msra.mxu0 %v1638
  %1663 = vmatpush.bf16.msra.mxu0 %v1637
  %1664 = vmatpush.bf16.msra.mxu0 %v1636
  %1665 = vmatpush.bf16.msra.mxu0 %v1635
  %1666 = vmatpush.bf16.msra.mxu0 %v1634
  %1667 = vmatmul.bf16.gmra.mxu0 %v177
  %v1668 = vpop.f32.mrf.mxu0
  %v1669 = vadd.f32 %v1643, %v1668
  %v1670 = vpop.f32.mrf.mxu0
  %v1671 = vadd.f32 %v1644, %v1670
  %1672 = vmatmul.bf16.gmra.mxu0 %v178
  %v1673 = vpop.f32.mrf.mxu0
  %v1674 = vadd.f32 %v1645, %v1673
  %v1675 = vpop.f32.mrf.mxu0
  %v1676 = vadd.f32 %v1646, %v1675
  %1677 = vmatmul.bf16.gmra.mxu0 %v179
  %v1678 = vpop.f32.mrf.mxu0
  %v1679 = vadd.f32 %v1647, %v1678
  %v1680 = vpop.f32.mrf.mxu0
  %v1681 = vadd.f32 %v1648, %v1680
  %1682 = vmatmul.bf16.gmra.mxu0 %v180
  %v1683 = vpop.f32.mrf.mxu0
  %v1684 = vadd.f32 %v1649, %v1683
  %v1685 = vpop.f32.mrf.mxu0
  %v1686 = vadd.f32 %v1650, %v1685
  %1687 = vmatmul.bf16.gmra.mxu0 %v181
  %v1688 = vpop.f32.mrf.mxu0
  %v1689 = vadd.f32 %v1651, %v1688
  %v1690 = vpop.f32.mrf.mxu0
  %v1691 = vadd.f32 %v1652, %v1690
  %1692 = vmatmul.bf16.gmra.mxu0 %v182
  %v1693 = vpop.f32.mrf.mxu0
  %v1694 = vadd.f32 %v1653, %v1693
  %v1695 = vpop.f32.mrf.mxu0
  %v1696 = vadd.f32 %v1654, %v1695
  %1697 = vmatmul.bf16.gmra.mxu0 %v183
  %v1698 = vpop.f32.mrf.mxu0
  %v1699 = vadd.f32 %v1655, %v1698
  %v1700 = vpop.f32.mrf.mxu0
  %v1701 = vadd.f32 %v1656, %v1700
  %1702 = vmatmul.bf16.gmra.mxu0 %v184
  %v1703 = vpop.f32.mrf.mxu0
  %v1704 = vadd.f32 %v1657, %v1703
  %v1705 = vpop.f32.mrf.mxu0
  %v1706 = vadd.f32 %v1658, %v1705
  %1707 = vdwg.mxu0
  %v1708 = vpack.c.bf16 %v1671, %v1669
  %v1709 = vpack.c.bf16 %v1676, %v1674
  %v1710 = vpack.c.bf16 %v1681, %v1679
  %v1711 = vpack.c.bf16 %v1686, %v1684
  %v1712 = vpack.c.bf16 %v1691, %v1689
  %v1713 = vpack.c.bf16 %v1696, %v1694
  %v1714 = vpack.c.bf16 %v1701, %v1699
  %v1715 = vpack.c.bf16 %v1706, %v1704
  %s1716 = scalar_lea.vmem %s3, 256
  %v1717 = vld [vmem:[%s1716] sm:$0xff]
  %v1718 = vld [vmem:[%s1716 + $0x8] sm:$0xff]
  %v1719 = vld [vmem:[%s1716 + $0x10] sm:$0xff]
  %v1720 = vld [vmem:[%s1716 + $0x18] sm:$0xff]
  %v1721 = vld [vmem:[%s1716 + $0x20] sm:$0xff]
  %v1722 = vld [vmem:[%s1716 + $0x28] sm:$0xff]
  %v1723 = vld [vmem:[%s1716 + $0x30] sm:$0xff]
  %v1724 = vld [vmem:[%s1716 + $0x38] sm:$0xff]
  %v1725 = vld [vmem:[%s1716 + $0x40] sm:$0xff]
  %v1726 = vld [vmem:[%s1716 + $0x48] sm:$0xff]
  %v1727 = vld [vmem:[%s1716 + $0x50] sm:$0xff]
  %v1728 = vld [vmem:[%s1716 + $0x58] sm:$0xff]
  %v1729 = vld [vmem:[%s1716 + $0x60] sm:$0xff]
  %v1730 = vld [vmem:[%s1716 + $0x68] sm:$0xff]
  %v1731 = vld [vmem:[%s1716 + $0x70] sm:$0xff]
  %v1732 = vld [vmem:[%s1716 + $0x78] sm:$0xff]
  %v1734 = vperm.slane %v1633, 0
  %v1735 = vperm.slane %v1633, 4
  %v1738 = vperm.slane %v1734, 0
  %v1739 = vperm.slane %v1735, 0
  %v1756 = vunpack.c.l.b16 %v1717
  %v1757 = vunpack.c.h.b16 %v1717
  %v1758 = vunpack.c.l.b16 %v1718
  %v1759 = vunpack.c.h.b16 %v1718
  %v1760 = vunpack.c.l.b16 %v1719
  %v1761 = vunpack.c.h.b16 %v1719
  %v1762 = vunpack.c.l.b16 %v1720
  %v1763 = vunpack.c.h.b16 %v1720
  %v1764 = vunpack.c.l.b16 %v1721
  %v1765 = vunpack.c.h.b16 %v1721
  %v1766 = vunpack.c.l.b16 %v1722
  %v1767 = vunpack.c.h.b16 %v1722
  %v1768 = vunpack.c.l.b16 %v1723
  %v1769 = vunpack.c.h.b16 %v1723
  %v1770 = vunpack.c.l.b16 %v1724
  %v1771 = vunpack.c.h.b16 %v1724
  %v1772 = vunpack.c.l.b16 %v1725
  %v1773 = vunpack.c.h.b16 %v1725
  %v1774 = vunpack.c.l.b16 %v1726
  %v1775 = vunpack.c.h.b16 %v1726
  %v1776 = vunpack.c.l.b16 %v1727
  %v1777 = vunpack.c.h.b16 %v1727
  %v1778 = vunpack.c.l.b16 %v1728
  %v1779 = vunpack.c.h.b16 %v1728
  %v1780 = vunpack.c.l.b16 %v1729
  %v1781 = vunpack.c.h.b16 %v1729
  %v1782 = vunpack.c.l.b16 %v1730
  %v1783 = vunpack.c.h.b16 %v1730
  %v1784 = vunpack.c.l.b16 %v1731
  %v1785 = vunpack.c.h.b16 %v1731
  %v1786 = vunpack.c.l.b16 %v1732
  %v1787 = vunpack.c.h.b16 %v1732
  %v1788 = vpack.c.b16 %v1758, %v1756
  %v1789 = vpack.c.b16 %v1759, %v1757
  %v1790 = vpack.c.b16 %v1762, %v1760
  %v1791 = vpack.c.b16 %v1763, %v1761
  %v1792 = vpack.c.b16 %v1766, %v1764
  %v1793 = vpack.c.b16 %v1767, %v1765
  %v1794 = vpack.c.b16 %v1770, %v1768
  %v1795 = vpack.c.b16 %v1771, %v1769
  %v1796 = vpack.c.b16 %v1774, %v1772
  %v1797 = vpack.c.b16 %v1775, %v1773
  %v1798 = vpack.c.b16 %v1778, %v1776
  %v1799 = vpack.c.b16 %v1779, %v1777
  %v1800 = vpack.c.b16 %v1782, %v1780
  %v1801 = vpack.c.b16 %v1783, %v1781
  %v1802 = vpack.c.b16 %v1786, %v1784
  %v1803 = vpack.c.b16 %v1787, %v1785
  %1820 = vmatpush.bf16.msra.mxu0 %v1802
  %1821 = vmatpush.bf16.msra.mxu0 %v1800
  %1822 = vmatpush.bf16.msra.mxu0 %v1798
  %1823 = vmatpush.bf16.msra.mxu0 %v1796
  %1824 = vmatpush.bf16.msra.mxu0 %v1794
  %1825 = vmatpush.bf16.msra.mxu0 %v1792
  %1826 = vmatpush.bf16.msra.mxu0 %v1790
  %1827 = vmatpush.bf16.msra.mxu0 %v1788
  %1828 = vmatmul.bf16.gmra.mxu0 %v1708
  %v1829 = vpop.f32.mrf.mxu0
  %v1830 = vadd.f32 %v1738, %v1829
  %v1831 = vpop.f32.mrf.mxu0
  %v1832 = vadd.f32 %v1738, %v1831
  %1833 = vmatmul.bf16.gmra.mxu0 %v1709
  %v1834 = vpop.f32.mrf.mxu0
  %v1835 = vadd.f32 %v1738, %v1834
  %v1836 = vpop.f32.mrf.mxu0
  %v1837 = vadd.f32 %v1738, %v1836
  %1838 = vmatmul.bf16.gmra.mxu0 %v1710
  %v1839 = vpop.f32.mrf.mxu0
  %v1840 = vadd.f32 %v1738, %v1839
  %v1841 = vpop.f32.mrf.mxu0
  %v1842 = vadd.f32 %v1738, %v1841
  %1843 = vmatmul.bf16.gmra.mxu0 %v1711
  %v1844 = vpop.f32.mrf.mxu0
  %v1845 = vadd.f32 %v1738, %v1844
  %v1846 = vpop.f32.mrf.mxu0
  %v1847 = vadd.f32 %v1738, %v1846
  %1848 = vmatmul.bf16.gmra.mxu0 %v1712
  %v1849 = vpop.f32.mrf.mxu0
  %v1850 = vadd.f32 %v1738, %v1849
  %v1851 = vpop.f32.mrf.mxu0
  %v1852 = vadd.f32 %v1738, %v1851
  %1853 = vmatmul.bf16.gmra.mxu0 %v1713
  %v1854 = vpop.f32.mrf.mxu0
  %v1855 = vadd.f32 %v1738, %v1854
  %v1856 = vpop.f32.mrf.mxu0
  %v1857 = vadd.f32 %v1738, %v1856
  %1858 = vmatmul.bf16.gmra.mxu0 %v1714
  %v1859 = vpop.f32.mrf.mxu0
  %v1860 = vadd.f32 %v1738, %v1859
  %v1861 = vpop.f32.mrf.mxu0
  %v1862 = vadd.f32 %v1738, %v1861
  %1863 = vmatmul.bf16.gmra.mxu0 %v1715
  %v1864 = vpop.f32.mrf.mxu0
  %v1865 = vadd.f32 %v1738, %v1864
  %v1866 = vpop.f32.mrf.mxu0
  %v1867 = vadd.f32 %v1738, %v1866
  %1868 = vdwg.mxu0
  %1869 = vmatpush.bf16.msra.mxu0 %v1803
  %1870 = vmatpush.bf16.msra.mxu0 %v1801
  %1871 = vmatpush.bf16.msra.mxu0 %v1799
  %1872 = vmatpush.bf16.msra.mxu0 %v1797
  %1873 = vmatpush.bf16.msra.mxu0 %v1795
  %1874 = vmatpush.bf16.msra.mxu0 %v1793
  %1875 = vmatpush.bf16.msra.mxu0 %v1791
  %1876 = vmatpush.bf16.msra.mxu0 %v1789
  %1877 = vmatmul.bf16.gmra.mxu0 %v1708
  %v1878 = vpop.f32.mrf.mxu0
  %v1879 = vadd.f32 %v1739, %v1878
  %v1880 = vpop.f32.mrf.mxu0
  %v1881 = vadd.f32 %v1739, %v1880
  %1882 = vmatmul.bf16.gmra.mxu0 %v1709
  %v1883 = vpop.f32.mrf.mxu0
  %v1884 = vadd.f32 %v1739, %v1883
  %v1885 = vpop.f32.mrf.mxu0
  %v1886 = vadd.f32 %v1739, %v1885
  %1887 = vmatmul.bf16.gmra.mxu0 %v1710
  %v1888 = vpop.f32.mrf.mxu0
  %v1889 = vadd.f32 %v1739, %v1888
  %v1890 = vpop.f32.mrf.mxu0
  %v1891 = vadd.f32 %v1739, %v1890
  %1892 = vmatmul.bf16.gmra.mxu0 %v1711
  %v1893 = vpop.f32.mrf.mxu0
  %v1894 = vadd.f32 %v1739, %v1893
  %v1895 = vpop.f32.mrf.mxu0
  %v1896 = vadd.f32 %v1739, %v1895
  %1897 = vmatmul.bf16.gmra.mxu0 %v1712
  %v1898 = vpop.f32.mrf.mxu0
  %v1899 = vadd.f32 %v1739, %v1898
  %v1900 = vpop.f32.mrf.mxu0
  %v1901 = vadd.f32 %v1739, %v1900
  %1902 = vmatmul.bf16.gmra.mxu0 %v1713
  %v1903 = vpop.f32.mrf.mxu0
  %v1904 = vadd.f32 %v1739, %v1903
  %v1905 = vpop.f32.mrf.mxu0
  %v1906 = vadd.f32 %v1739, %v1905
  %1907 = vmatmul.bf16.gmra.mxu0 %v1714
  %v1908 = vpop.f32.mrf.mxu0
  %v1909 = vadd.f32 %v1739, %v1908
  %v1910 = vpop.f32.mrf.mxu0
  %v1911 = vadd.f32 %v1739, %v1910
  %1912 = vmatmul.bf16.gmra.mxu0 %v1715
  %v1913 = vpop.f32.mrf.mxu0
  %v1914 = vadd.f32 %v1739, %v1913
  %v1915 = vpop.f32.mrf.mxu0
  %v1916 = vadd.f32 %v1739, %v1915
  %1917 = vdwg.mxu0
  %v1918 = vmax.f32 %v1830, 0.0
  %v1919 = vmax.f32 %v1879, 0.0
  %v1920 = vmax.f32 %v1832, 0.0
  %v1921 = vmax.f32 %v1881, 0.0
  %v1922 = vmax.f32 %v1835, 0.0
  %v1923 = vmax.f32 %v1884, 0.0
  %v1924 = vmax.f32 %v1837, 0.0
  %v1925 = vmax.f32 %v1886, 0.0
  %v1926 = vmax.f32 %v1840, 0.0
  %v1927 = vmax.f32 %v1889, 0.0
  %v1928 = vmax.f32 %v1842, 0.0
  %v1929 = vmax.f32 %v1891, 0.0
  %v1930 = vmax.f32 %v1845, 0.0
  %v1931 = vmax.f32 %v1894, 0.0
  %v1932 = vmax.f32 %v1847, 0.0
  %v1933 = vmax.f32 %v1896, 0.0
  %v1934 = vmax.f32 %v1850, 0.0
  %v1935 = vmax.f32 %v1899, 0.0
  %v1936 = vmax.f32 %v1852, 0.0
  %v1937 = vmax.f32 %v1901, 0.0
  %v1938 = vmax.f32 %v1855, 0.0
  %v1939 = vmax.f32 %v1904, 0.0
  %v1940 = vmax.f32 %v1857, 0.0
  %v1941 = vmax.f32 %v1906, 0.0
  %v1942 = vmax.f32 %v1860, 0.0
  %v1943 = vmax.f32 %v1909, 0.0
  %v1944 = vmax.f32 %v1862, 0.0
  %v1945 = vmax.f32 %v1911, 0.0
  %v1946 = vmax.f32 %v1865, 0.0
  %v1947 = vmax.f32 %v1914, 0.0
  %v1948 = vmax.f32 %v1867, 0.0
  %v1949 = vmax.f32 %v1916, 0.0
  %v1950 = vpack.c.bf16 %v1920, %v1918
  %v1951 = vpack.c.bf16 %v1921, %v1919
  %v1952 = vpack.c.bf16 %v1924, %v1922
  %v1953 = vpack.c.bf16 %v1925, %v1923
  %v1954 = vpack.c.bf16 %v1928, %v1926
  %v1955 = vpack.c.bf16 %v1929, %v1927
  %v1956 = vpack.c.bf16 %v1932, %v1930
  %v1957 = vpack.c.bf16 %v1933, %v1931
  %v1958 = vpack.c.bf16 %v1936, %v1934
  %v1959 = vpack.c.bf16 %v1937, %v1935
  %v1960 = vpack.c.bf16 %v1940, %v1938
  %v1961 = vpack.c.bf16 %v1941, %v1939
  %v1962 = vpack.c.bf16 %v1944, %v1942
  %v1963 = vpack.c.bf16 %v1945, %v1943
  %v1964 = vpack.c.bf16 %v1948, %v1946
  %v1965 = vpack.c.bf16 %v1949, %v1947
  %s1966 = scalar_lea.vmem %s4, 256
  %v1967 = vld [vmem:[%s1966] sm:$0xf]
  %v1968 = vld [vmem:[%s1966 + $0x4] sm:$0xf]
  %v1969 = vld [vmem:[%s1966 + $0x8] sm:$0xf]
  %v1970 = vld [vmem:[%s1966 + $0xc] sm:$0xf]
  %v1971 = vld [vmem:[%s1966 + $0x10] sm:$0xf]
  %v1972 = vld [vmem:[%s1966 + $0x14] sm:$0xf]
  %v1973 = vld [vmem:[%s1966 + $0x18] sm:$0xf]
  %v1974 = vld [vmem:[%s1966 + $0x1c] sm:$0xf]
  %v1975 = vld [vmem:[%s1966 + $0x20] sm:$0xf]
  %v1976 = vld [vmem:[%s1966 + $0x24] sm:$0xf]
  %v1977 = vld [vmem:[%s1966 + $0x28] sm:$0xf]
  %v1978 = vld [vmem:[%s1966 + $0x2c] sm:$0xf]
  %v1979 = vld [vmem:[%s1966 + $0x30] sm:$0xf]
  %v1980 = vld [vmem:[%s1966 + $0x34] sm:$0xf]
  %v1981 = vld [vmem:[%s1966 + $0x38] sm:$0xf]
  %v1982 = vld [vmem:[%s1966 + $0x3c] sm:$0xf]
  %v1983 = vld [vmem:[%s1966 + $0x40] sm:$0xf]
  %v1984 = vld [vmem:[%s1966 + $0x44] sm:$0xf]
  %v1985 = vld [vmem:[%s1966 + $0x48] sm:$0xf]
  %v1986 = vld [vmem:[%s1966 + $0x4c] sm:$0xf]
  %v1987 = vld [vmem:[%s1966 + $0x50] sm:$0xf]
  %v1988 = vld [vmem:[%s1966 + $0x54] sm:$0xf]
  %v1989 = vld [vmem:[%s1966 + $0x58] sm:$0xf]
  %v1990 = vld [vmem:[%s1966 + $0x5c] sm:$0xf]
  %v1991 = vld [vmem:[%s1966 + $0x60] sm:$0xf]
  %v1992 = vld [vmem:[%s1966 + $0x64] sm:$0xf]
  %v1993 = vld [vmem:[%s1966 + $0x68] sm:$0xf]
  %v1994 = vld [vmem:[%s1966 + $0x6c] sm:$0xf]
  %v1995 = vld [vmem:[%s1966 + $0x70] sm:$0xf]
  %v1996 = vld [vmem:[%s1966 + $0x74] sm:$0xf]
  %v1997 = vld [vmem:[%s1966 + $0x78] sm:$0xf]
  %v1998 = vld [vmem:[%s1966 + $0x7c] sm:$0xf]
  %v1999 = vperm.slane %v1633, 1
  %v2032 = vunpack.c.l.b16 %v1967
  %v2033 = vunpack.c.l.b16 %v1968
  %v2034 = vunpack.c.l.b16 %v1969
  %v2035 = vunpack.c.l.b16 %v1970
  %v2036 = vunpack.c.l.b16 %v1971
  %v2037 = vunpack.c.l.b16 %v1972
  %v2038 = vunpack.c.l.b16 %v1973
  %v2039 = vunpack.c.l.b16 %v1974
  %v2040 = vunpack.c.l.b16 %v1975
  %v2041 = vunpack.c.l.b16 %v1976
  %v2042 = vunpack.c.l.b16 %v1977
  %v2043 = vunpack.c.l.b16 %v1978
  %v2044 = vunpack.c.l.b16 %v1979
  %v2045 = vunpack.c.l.b16 %v1980
  %v2046 = vunpack.c.l.b16 %v1981
  %v2047 = vunpack.c.l.b16 %v1982
  %v2048 = vunpack.c.l.b16 %v1983
  %v2049 = vunpack.c.l.b16 %v1984
  %v2050 = vunpack.c.l.b16 %v1985
  %v2051 = vunpack.c.l.b16 %v1986
  %v2052 = vunpack.c.l.b16 %v1987
  %v2053 = vunpack.c.l.b16 %v1988
  %v2054 = vunpack.c.l.b16 %v1989
  %v2055 = vunpack.c.l.b16 %v1990
  %v2056 = vunpack.c.l.b16 %v1991
  %v2057 = vunpack.c.l.b16 %v1992
  %v2058 = vunpack.c.l.b16 %v1993
  %v2059 = vunpack.c.l.b16 %v1994
  %v2060 = vunpack.c.l.b16 %v1995
  %v2061 = vunpack.c.l.b16 %v1996
  %v2062 = vunpack.c.l.b16 %v1997
  %v2063 = vunpack.c.l.b16 %v1998
  %v2064 = vpack.c.b16 %v2033, %v2032
  %v2065 = vpack.c.b16 %v2035, %v2034
  %v2066 = vpack.c.b16 %v2037, %v2036
  %v2067 = vpack.c.b16 %v2039, %v2038
  %v2068 = vpack.c.b16 %v2041, %v2040
  %v2069 = vpack.c.b16 %v2043, %v2042
  %v2070 = vpack.c.b16 %v2045, %v2044
  %v2071 = vpack.c.b16 %v2047, %v2046
  %v2072 = vpack.c.b16 %v2049, %v2048
  %v2073 = vpack.c.b16 %v2051, %v2050
  %v2074 = vpack.c.b16 %v2053, %v2052
  %v2075 = vpack.c.b16 %v2055, %v2054
  %v2076 = vpack.c.b16 %v2057, %v2056
  %v2077 = vpack.c.b16 %v2059, %v2058
  %v2078 = vpack.c.b16 %v2061, %v2060
  %v2079 = vpack.c.b16 %v2063, %v2062
  %2096 = vmatpush.bf16.msra.mxu0 %v2071
  %2097 = vmatpush.bf16.msra.mxu0 %v2070
  %2098 = vmatpush.bf16.msra.mxu0 %v2069
  %2099 = vmatpush.bf16.msra.mxu0 %v2068
  %2100 = vmatpush.bf16.msra.mxu0 %v2067
  %2101 = vmatpush.bf16.msra.mxu0 %v2066
  %2102 = vmatpush.bf16.msra.mxu0 %v2065
  %2103 = vmatpush.bf16.msra.mxu0 %v2064
  %2104 = vmatmul.bf16.gmra.mxu0 %v1950
  %v2105 = vpop.f32.mrf.mxu0
  %v2106 = vadd.f32 %v1999, %v2105
  %v2107 = vpop.f32.mrf.mxu0
  %v2108 = vadd.f32 %v1999, %v2107
  %2109 = vmatmul.bf16.gmra.mxu0 %v1952
  %v2110 = vpop.f32.mrf.mxu0
  %v2111 = vadd.f32 %v1999, %v2110
  %v2112 = vpop.f32.mrf.mxu0
  %v2113 = vadd.f32 %v1999, %v2112
  %2114 = vmatmul.bf16.gmra.mxu0 %v1954
  %v2115 = vpop.f32.mrf.mxu0
  %v2116 = vadd.f32 %v1999, %v2115
  %v2117 = vpop.f32.mrf.mxu0
  %v2118 = vadd.f32 %v1999, %v2117
  %2119 = vmatmul.bf16.gmra.mxu0 %v1956
  %v2120 = vpop.f32.mrf.mxu0
  %v2121 = vadd.f32 %v1999, %v2120
  %v2122 = vpop.f32.mrf.mxu0
  %v2123 = vadd.f32 %v1999, %v2122
  %2124 = vmatmul.bf16.gmra.mxu0 %v1958
  %v2125 = vpop.f32.mrf.mxu0
  %v2126 = vadd.f32 %v1999, %v2125
  %v2127 = vpop.f32.mrf.mxu0
  %v2128 = vadd.f32 %v1999, %v2127
  %2129 = vmatmul.bf16.gmra.mxu0 %v1960
  %v2130 = vpop.f32.mrf.mxu0
  %v2131 = vadd.f32 %v1999, %v2130
  %v2132 = vpop.f32.mrf.mxu0
  %v2133 = vadd.f32 %v1999, %v2132
  %2134 = vmatmul.bf16.gmra.mxu0 %v1962
  %v2135 = vpop.f32.mrf.mxu0
  %v2136 = vadd.f32 %v1999, %v2135
  %v2137 = vpop.f32.mrf.mxu0
  %v2138 = vadd.f32 %v1999, %v2137
  %2139 = vmatmul.bf16.gmra.mxu0 %v1964
  %v2140 = vpop.f32.mrf.mxu0
  %v2141 = vadd.f32 %v1999, %v2140
  %v2142 = vpop.f32.mrf.mxu0
  %v2143 = vadd.f32 %v1999, %v2142
  %2144 = vdwg.mxu0
  %2145 = vmatpush.bf16.msra.mxu0 %v2079
  %2146 = vmatpush.bf16.msra.mxu0 %v2078
  %2147 = vmatpush.bf16.msra.mxu0 %v2077
  %2148 = vmatpush.bf16.msra.mxu0 %v2076
  %2149 = vmatpush.bf16.msra.mxu0 %v2075
  %2150 = vmatpush.bf16.msra.mxu0 %v2074
  %2151 = vmatpush.bf16.msra.mxu0 %v2073
  %2152 = vmatpush.bf16.msra.mxu0 %v2072
  %2153 = vmatmul.bf16.gmra.mxu0 %v1951
  %v2154 = vpop.f32.mrf.mxu0
  %v2155 = vadd.f32 %v2106, %v2154
  %v2156 = vpop.f32.mrf.mxu0
  %v2157 = vadd.f32 %v2108, %v2156
  %2158 = vmatmul.bf16.gmra.mxu0 %v1953
  %v2159 = vpop.f32.mrf.mxu0
  %v2160 = vadd.f32 %v2111, %v2159
  %v2161 = vpop.f32.mrf.mxu0
  %v2162 = vadd.f32 %v2113, %v2161
  %2163 = vmatmul.bf16.gmra.mxu0 %v1955
  %v2164 = vpop.f32.mrf.mxu0
  %v2165 = vadd.f32 %v2116, %v2164
  %v2166 = vpop.f32.mrf.mxu0
  %v2167 = vadd.f32 %v2118, %v2166
  %2168 = vmatmul.bf16.gmra.mxu0 %v1957
  %v2169 = vpop.f32.mrf.mxu0
  %v2170 = vadd.f32 %v2121, %v2169
  %v2171 = vpop.f32.mrf.mxu0
  %v2172 = vadd.f32 %v2123, %v2171
  %2173 = vmatmul.bf16.gmra.mxu0 %v1959
  %v2174 = vpop.f32.mrf.mxu0
  %v2175 = vadd.f32 %v2126, %v2174
  %v2176 = vpop.f32.mrf.mxu0
  %v2177 = vadd.f32 %v2128, %v2176
  %2178 = vmatmul.bf16.gmra.mxu0 %v1961
  %v2179 = vpop.f32.mrf.mxu0
  %v2180 = vadd.f32 %v2131, %v2179
  %v2181 = vpop.f32.mrf.mxu0
  %v2182 = vadd.f32 %v2133, %v2181
  %2183 = vmatmul.bf16.gmra.mxu0 %v1963
  %v2184 = vpop.f32.mrf.mxu0
  %v2185 = vadd.f32 %v2136, %v2184
  %v2186 = vpop.f32.mrf.mxu0
  %v2187 = vadd.f32 %v2138, %v2186
  %2188 = vmatmul.bf16.gmra.mxu0 %v1965
  %v2189 = vpop.f32.mrf.mxu0
  %v2190 = vadd.f32 %v2141, %v2189
  %v2191 = vpop.f32.mrf.mxu0
  %v2192 = vadd.f32 %v2143, %v2191
  %2193 = vdwg.mxu0
  %v2194 = vmul.f32 %v2155, %v104
  %v2195 = vmul.f32 %v2157, %v105
  %v2196 = vmul.f32 %v2160, %v106
  %v2197 = vmul.f32 %v2162, %v107
  %v2198 = vmul.f32 %v2165, %v108
  %v2199 = vmul.f32 %v2167, %v109
  %v2200 = vmul.f32 %v2170, %v110
  %v2201 = vmul.f32 %v2172, %v111
  %v2202 = vmul.f32 %v2175, %v112
  %v2203 = vmul.f32 %v2177, %v113
  %v2204 = vmul.f32 %v2180, %v114
  %v2205 = vmul.f32 %v2182, %v115
  %v2206 = vmul.f32 %v2185, %v116
  %v2207 = vmul.f32 %v2187, %v117
  %v2208 = vmul.f32 %v2190, %v118
  %v2209 = vmul.f32 %v2192, %v119
  %v2210 = vadd.f32 %v2194, %v2195
  %v2211 = vadd.f32 %v2210, %v2196
  %v2212 = vadd.f32 %v2211, %v2197
  %v2213 = vadd.f32 %v2212, %v2198
  %v2214 = vadd.f32 %v2213, %v2199
  %v2215 = vadd.f32 %v2214, %v2200
  %v2216 = vadd.f32 %v2215, %v2201
  %v2217 = vadd.f32 %v2216, %v2202
  %v2218 = vadd.f32 %v2217, %v2203
  %v2219 = vadd.f32 %v2218, %v2204
  %v2220 = vadd.f32 %v2219, %v2205
  %v2221 = vadd.f32 %v2220, %v2206
  %v2222 = vadd.f32 %v2221, %v2207
  %v2223 = vadd.f32 %v2222, %v2208
  %v2224 = vadd.f32 %v2223, %v2209
  %v2225 = vrot.slane %v2224, 4
  %v2226 = vadd.f32 %v2224, %v2225
  %v2227 = vrot.slane %v2226, 2
  %v2228 = vadd.f32 %v2226, %v2227
  %v2229 = vrot.slane %v2228, 1
  %v2230 = vadd.f32 %v2228, %v2229
  %v2231 = vmul.f32 %v2230, 0.041666668
  %v2232 = vmul.f32 %v2194, %v2194
  %v2233 = vmul.f32 %v2195, %v2195
  %v2234 = vmul.f32 %v2196, %v2196
  %v2235 = vmul.f32 %v2197, %v2197
  %v2236 = vmul.f32 %v2198, %v2198
  %v2237 = vmul.f32 %v2199, %v2199
  %v2238 = vmul.f32 %v2200, %v2200
  %v2239 = vmul.f32 %v2201, %v2201
  %v2240 = vmul.f32 %v2202, %v2202
  %v2241 = vmul.f32 %v2203, %v2203
  %v2242 = vmul.f32 %v2204, %v2204
  %v2243 = vmul.f32 %v2205, %v2205
  %v2244 = vmul.f32 %v2206, %v2206
  %v2245 = vmul.f32 %v2207, %v2207
  %v2246 = vmul.f32 %v2208, %v2208
  %v2247 = vmul.f32 %v2209, %v2209
  %v2248 = vadd.f32 %v2232, %v2233
  %v2249 = vadd.f32 %v2248, %v2234
  %v2250 = vadd.f32 %v2249, %v2235
  %v2251 = vadd.f32 %v2250, %v2236
  %v2252 = vadd.f32 %v2251, %v2237
  %v2253 = vadd.f32 %v2252, %v2238
  %v2254 = vadd.f32 %v2253, %v2239
  %v2255 = vadd.f32 %v2254, %v2240
  %v2256 = vadd.f32 %v2255, %v2241
  %v2257 = vadd.f32 %v2256, %v2242
  %v2258 = vadd.f32 %v2257, %v2243
  %v2259 = vadd.f32 %v2258, %v2244
  %v2260 = vadd.f32 %v2259, %v2245
  %v2261 = vadd.f32 %v2260, %v2246
  %v2262 = vadd.f32 %v2261, %v2247
  %v2263 = vrot.slane %v2262, 4
  %v2264 = vadd.f32 %v2262, %v2263
  %v2265 = vrot.slane %v2264, 2
  %v2266 = vadd.f32 %v2264, %v2265
  %v2267 = vrot.slane %v2266, 1
  %v2268 = vadd.f32 %v2266, %v2267
  %v2269 = vmul.f32 %v2268, 0.041666668
  %v2270 = vmul.f32 %v2231, %v2231
  %v2271 = vsub.f32 %v2269, %v2270
  %v2272 = vmax.f32 %v2271, 0.0
  %v2273 = vsub.f32 %v2155, %v2231
  %v2274 = vsub.f32 %v2157, %v2231
  %v2275 = vsub.f32 %v2160, %v2231
  %v2276 = vsub.f32 %v2162, %v2231
  %v2277 = vsub.f32 %v2165, %v2231
  %v2278 = vsub.f32 %v2167, %v2231
  %v2279 = vsub.f32 %v2170, %v2231
  %v2280 = vsub.f32 %v2172, %v2231
  %v2281 = vsub.f32 %v2175, %v2231
  %v2282 = vsub.f32 %v2177, %v2231
  %v2283 = vsub.f32 %v2180, %v2231
  %v2284 = vsub.f32 %v2182, %v2231
  %v2285 = vsub.f32 %v2185, %v2231
  %v2286 = vsub.f32 %v2187, %v2231
  %v2287 = vsub.f32 %v2190, %v2231
  %v2288 = vsub.f32 %v2192, %v2231
  %v2289 = vadd.f32 %v2272, 1e-05
  %v2290 = vrsqrt.pop %v2289
  %v2291 = vmul.f32 %v2290, %v2289
  %v2292 = vmul.f32 %v2291, %v2290
  %v2293 = vmul.f32 0.5, %v2292
  %v2294 = vsub.f32 1.5, %v2293
  %v2295 = vmul.f32 %v2290, %v2294
  %vm2296 = vweird.f32 %v2289
  %vm2297 = vweird.f32 %v2290
  %vm2298 = vmor %vm2296, %vm2297
  %v2299 = vsel %vm2298, %v2290, %v2295
  %v2300 = vmul.f32 %v2273, %v2299
  %v2301 = vmul.f32 %v2274, %v2299
  %v2302 = vmul.f32 %v2275, %v2299
  %v2303 = vmul.f32 %v2276, %v2299
  %v2304 = vmul.f32 %v2277, %v2299
  %v2305 = vmul.f32 %v2278, %v2299
  %v2306 = vmul.f32 %v2279, %v2299
  %v2307 = vmul.f32 %v2280, %v2299
  %v2308 = vmul.f32 %v2281, %v2299
  %v2309 = vmul.f32 %v2282, %v2299
  %v2310 = vmul.f32 %v2283, %v2299
  %v2311 = vmul.f32 %v2284, %v2299
  %v2312 = vmul.f32 %v2285, %v2299
  %v2313 = vmul.f32 %v2286, %v2299
  %v2314 = vmul.f32 %v2287, %v2299
  %v2315 = vmul.f32 %v2288, %v2299
  %v2316 = vperm.slane %v1633, 2
  %v2317 = vmul.f32 %v2300, %v2316
  %v2318 = vmul.f32 %v2301, %v2316
  %v2319 = vmul.f32 %v2302, %v2316
  %v2320 = vmul.f32 %v2303, %v2316
  %v2321 = vmul.f32 %v2304, %v2316
  %v2322 = vmul.f32 %v2305, %v2316
  %v2323 = vmul.f32 %v2306, %v2316
  %v2324 = vmul.f32 %v2307, %v2316
  %v2325 = vmul.f32 %v2308, %v2316
  %v2326 = vmul.f32 %v2309, %v2316
  %v2327 = vmul.f32 %v2310, %v2316
  %v2328 = vmul.f32 %v2311, %v2316
  %v2329 = vmul.f32 %v2312, %v2316
  %v2330 = vmul.f32 %v2313, %v2316
  %v2331 = vmul.f32 %v2314, %v2316
  %v2332 = vmul.f32 %v2315, %v2316
  %v2333 = vperm.slane %v1633, 3
  %v2334 = vadd.f32 %v2317, %v2333
  %v2335 = vadd.f32 %v2318, %v2333
  %v2336 = vadd.f32 %v2319, %v2333
  %v2337 = vadd.f32 %v2320, %v2333
  %v2338 = vadd.f32 %v2321, %v2333
  %v2339 = vadd.f32 %v2322, %v2333
  %v2340 = vadd.f32 %v2323, %v2333
  %v2341 = vadd.f32 %v2324, %v2333
  %v2342 = vadd.f32 %v2325, %v2333
  %v2343 = vadd.f32 %v2326, %v2333
  %v2344 = vadd.f32 %v2327, %v2333
  %v2345 = vadd.f32 %v2328, %v2333
  %v2346 = vadd.f32 %v2329, %v2333
  %v2347 = vadd.f32 %v2330, %v2333
  %v2348 = vadd.f32 %v2331, %v2333
  %v2349 = vadd.f32 %v2332, %v2333
  %2350 = vst [vmem:[%s6] sm:$0xff] %v2334
  %2351 = vst [vmem:[%s6 + $0x8] sm:$0xff] %v2335
  %2352 = vst [vmem:[%s6 + $0x10] sm:$0xff] %v2336
  %2353 = vst [vmem:[%s6 + $0x18] sm:$0xff] %v2337
  %2354 = vst [vmem:[%s6 + $0x20] sm:$0xff] %v2338
  %2355 = vst [vmem:[%s6 + $0x28] sm:$0xff] %v2339
  %2356 = vst [vmem:[%s6 + $0x30] sm:$0xff] %v2340
  %2357 = vst [vmem:[%s6 + $0x38] sm:$0xff] %v2341
  %2358 = vst [vmem:[%s6 + $0x40] sm:$0xff] %v2342
  %2359 = vst [vmem:[%s6 + $0x48] sm:$0xff] %v2343
  %2360 = vst [vmem:[%s6 + $0x50] sm:$0xff] %v2344
  %2361 = vst [vmem:[%s6 + $0x58] sm:$0xff] %v2345
  %2362 = vst [vmem:[%s6 + $0x60] sm:$0xff] %v2346
  %2363 = vst [vmem:[%s6 + $0x68] sm:$0xff] %v2347
  %2364 = vst [vmem:[%s6 + $0x70] sm:$0xff] %v2348
  %2365 = vst [vmem:[%s6 + $0x78] sm:$0xff] %v2349
  // Predicated region
  $region26: #{gnn_forward.1} parent=0 // pred_check
    _
  $region27: #{gnn_forward.1} parent=0 // pred_check_branch
    %2367 = sbr.rel (0) target = $region29
  $region28: #{gnn_forward.1} parent=0 // pred_region
    _
  $region29: #{gnn_forward.1} parent=0 // pred_fallthru
    _
  // Predicated region
  $region30: #{gnn_forward.1} parent=0 // pred_check
    _
  $region31: #{gnn_forward.1} parent=0 // pred_check_branch
    %2369 = sbr.rel (0) target = $region33
  $region32: #{gnn_forward.1} parent=0 // pred_region
    _
  $region33: #{gnn_forward.1} parent=0 // pred_fallthru
    _

</llo_original>
